<compile_context>
chip_gen: v7x
topology: tpu7x:2x2x1
jax: 0.10.0
libtpu: 0.0.40
codegen_flags: <defaults>
</compile_context>

<pallas_src>
import functools
import math

import jax
import jax.numpy as jnp
from jax import lax
from jax.experimental import pallas as pl
from jax.experimental.pallas import tpu as pltpu


def _gelu_tanh(x):
    # tanh-approximation GELU (EUP tanh slot on TPU).
    # TODO(synk): exact erf-based GELU (HuggingFace default) not used; kernel
    # and bundled reference both use the tanh approximation consistently.
    c = 0.7978845608028654  # sqrt(2/pi)
    return 0.5 * x * (1.0 + jnp.tanh(c * (x + 0.044715 * x * x * x)))


def _layer_norm_fused(x, gamma, beta, eps):
    # One-pass stats (sum + sum-of-squares); variance clamped at 0 so rsqrt
    # never sees a tiny negative from cancellation.
    n = x.shape[-1]
    s = jnp.sum(x, axis=-1, keepdims=True)
    ss = jnp.sum(x * x, axis=-1, keepdims=True)
    mu = s * (1.0 / n)
    var = jnp.maximum(ss * (1.0 / n) - mu * mu, 0.0)
    return (x - mu) * lax.rsqrt(var + eps) * gamma + beta


def _bert_layer_kernel(x_full_ref, x_tile_ref, mask_ref,
                       wq_ref, bq_ref, wkv_ref, bkv_ref,
                       wo_ref, bo_ref, ln1_g_ref, ln1_b_ref,
                       wi_ref, bi_ref, wo2_ref, bo2_ref, ln2_g_ref, ln2_b_ref,
                       out_ref, kv_ref, ctx_ref, *, num_heads, eps):
    """One full BertLayer for one (batch, query-tile) grid point."""
    qi = pl.program_id(1)
    S = x_full_ref.shape[1]
    H = x_full_ref.shape[2]
    d = H // num_heads
    bf16 = jnp.bfloat16

    # --- K/V for the whole sequence, computed once per batch element ----------
    @pl.when(qi == 0)
    def _():
        x_full = x_full_ref[0].astype(bf16)                         # (S, H)
        kv = jnp.dot(x_full, wkv_ref[...],
                     preferred_element_type=jnp.float32) + bkv_ref[...]
        kv_ref[...] = kv.astype(bf16)                               # (S, 2H)

    x_tile = x_tile_ref[0]                                          # (tS, H) f32
    mask = mask_ref[0]                                              # (1, S) additive

    # --- Q projection for this query tile (full-width N=H matmul) -------------
    # 1/sqrt(d) is pre-folded into wq/bq in the wrapper.
    q_all = (jnp.dot(x_tile.astype(bf16), wq_ref[...],
                     preferred_element_type=jnp.float32) + bq_ref[...]).astype(bf16)

    # --- per-head attention (static unroll; scores stay per-tile (tS,S)) ------
    for h in range(num_heads):
        qh = q_all[:, h * d:(h + 1) * d]                            # (tS, d) bf16
        kh = kv_ref[:, h * d:(h + 1) * d]                           # (S, d)  bf16
        vh = kv_ref[:, H + h * d:H + (h + 1) * d]                   # (S, d)  bf16
        s = lax.dot_general(qh, kh, (((1,), (1,)), ((), ())),
                            preferred_element_type=jnp.float32)     # (tS, S)
        s = s + mask
        m = jnp.max(s, axis=-1, keepdims=True)
        e = jnp.exp(s - m)
        p = e * pl.reciprocal(jnp.sum(e, axis=-1, keepdims=True), approx=True)
        ctx_ref[:, h * d:(h + 1) * d] = jnp.dot(
            p.astype(bf16), vh, preferred_element_type=jnp.float32)  # (tS, d)

    # --- single full-K output projection + residual + LayerNorm ---------------
    ctx = ctx_ref[...].astype(bf16)                                  # (tS, H)
    attn = jnp.dot(ctx, wo_ref[...],
                   preferred_element_type=jnp.float32) + bo_ref[...]
    h1 = _layer_norm_fused(attn + x_tile, ln1_g_ref[...], ln1_b_ref[...], eps)

    # --- feed-forward ----------------------------------------------------------
    inter = jnp.dot(h1.astype(bf16), wi_ref[...],
                    preferred_element_type=jnp.float32) + bi_ref[...]
    inter = _gelu_tanh(inter)
    ffn = jnp.dot(inter.astype(bf16), wo2_ref[...],
                  preferred_element_type=jnp.float32) + bo2_ref[...]
    out_ref[0] = _layer_norm_fused(ffn + h1, ln2_g_ref[...], ln2_b_ref[...], eps)


def _choose_seq_tile(S):
    if S <= 256:
        return S
    for t in (256, 128, 64, 32, 16, 8):
        if S % t == 0:
            return t
    return S


def bert_layer_forward(x, add_mask, p, *, num_heads, eps):
    """Apply one BertLayer with a fused Pallas kernel, gridded over (batch, q-tile)."""
    B, S, H = x.shape
    assert H % num_heads == 0
    d = H // num_heads
    inter = p["wi"].shape[1]
    tS = _choose_seq_tile(S)
    n_q = S // tS

    f32, bf16 = jnp.float32, jnp.bfloat16
    scale = 1.0 / math.sqrt(d)

    # bf16 weight slabs (MXU inputs); biases / LN params stay f32.
    wq = (p["wq"] * scale).astype(bf16)                               # (H, H), scale folded
    bq = (p["bq"] * scale).reshape(1, H).astype(f32)
    wkv = jnp.concatenate([p["wk"], p["wv"]], axis=1).astype(bf16)    # (H, 2H)
    bkv = jnp.concatenate([p["bk"], p["bv"]]).reshape(1, 2 * H).astype(f32)
    wo = p["wo"].astype(bf16)                                         # (H, H)
    bo = p["bo"].reshape(1, H).astype(f32)
    g1 = p["ln1_g"].reshape(1, H).astype(f32)
    b1 = p["ln1_b"].reshape(1, H).astype(f32)
    wi = p["wi"].astype(bf16)                                         # (H, I)
    bi = p["bi"].reshape(1, inter).astype(f32)
    wo2 = p["wo2"].astype(bf16)                                       # (I, H)
    bo2 = p["bo2"].reshape(1, H).astype(f32)
    g2 = p["ln2_g"].reshape(1, H).astype(f32)
    b2 = p["ln2_b"].reshape(1, H).astype(f32)

    # VMEM budget: bf16 weights (single-buffered), double-buffered activation
    # tiles, resident KV/ctx scratch, and in-kernel temporaries (scores, GELU
    # intermediate, residual slabs). Clamped to the device's physical VMEM.
    try:
        vmem_cap = int(pltpu.get_tpu_info().vmem_capacity_bytes)
    except Exception:
        vmem_cap = 64 << 20
    w_bytes = 2 * (H * H + 2 * H * H + H * H + H * inter + inter * H)
    small_bytes = 4 * (H + 2 * H + H + inter + 4 * H)
    io_bytes = 2 * 4 * (S * H + tS * H + S + tS * H)                   # x_full/x_tile/mask/out
    scratch_bytes = 2 * S * 2 * H + 4 * tS * H                         # kv (bf16) + ctx (f32)
    tmp_bytes = 4 * (3 * tS * S + 2 * tS * inter + 8 * tS * H)         # scores/intermediate/slabs
    est = w_bytes + small_bytes + io_bytes + scratch_bytes + tmp_bytes + (4 << 20)
    vmem_limit = int(min(max(est, 32 << 20), vmem_cap - (2 << 20)))

    kernel = functools.partial(_bert_layer_kernel, num_heads=num_heads, eps=eps)

    # Grid-invariant weights: single buffer (no double-buffering of large slabs).
    wspec = lambda shape: pl.BlockSpec(shape, lambda b, q: (0, 0),
                                       pipeline_mode=pl.Buffered(1))

    return pl.pallas_call(
        kernel,
        out_shape=jax.ShapeDtypeStruct((B, S, H), jnp.float32),
        grid_spec=pltpu.PrefetchScalarGridSpec(
            num_scalar_prefetch=0,
            grid=(B, n_q),
            in_specs=[
                pl.BlockSpec((1, S, H), lambda b, q: (b, 0, 0)),      # x (full seq, for K/V)
                pl.BlockSpec((1, tS, H), lambda b, q: (b, q, 0)),     # x (query tile / residual)
                pl.BlockSpec((1, 1, S), lambda b, q: (b, 0, 0)),      # additive attention mask
                wspec((H, H)),                                        # Wq (scale folded)
                wspec((1, H)),                                        # bq
                wspec((H, 2 * H)),                                    # W_kv fused
                wspec((1, 2 * H)),                                    # b_kv fused
                wspec((H, H)),                                        # Wo
                wspec((1, H)),                                        # bo
                wspec((1, H)),                                        # LN1 gamma
                wspec((1, H)),                                        # LN1 beta
                wspec((H, inter)),                                    # W intermediate
                wspec((1, inter)),                                    # b intermediate
                wspec((inter, H)),                                    # W output
                wspec((1, H)),                                        # b output
                wspec((1, H)),                                        # LN2 gamma
                wspec((1, H)),                                        # LN2 beta
            ],
            out_specs=pl.BlockSpec((1, tS, H), lambda b, q: (b, q, 0)),
            scratch_shapes=[
                pltpu.VMEM((S, 2 * H), jnp.bfloat16),                 # resident K|V per batch
                pltpu.VMEM((tS, H), jnp.float32),                     # per-head context concat
            ],
        ),
        compiler_params=pltpu.CompilerParams(
            dimension_semantics=("parallel", "arbitrary"),            # batch parallel (v7x 2-TC)
            vmem_limit_bytes=vmem_limit,
        ),
    )(x.astype(jnp.float32), x.astype(jnp.float32), add_mask.astype(jnp.float32),
      wq, bq, wkv, bkv, wo, bo, g1, b1, wi, bi, wo2, bo2, g2, b2)


def bert_encoder_forward(hidden_states, c_hidden_states, attention_mask, layer_params,
                         *, num_heads, eps=1e-12, head_mask=None,
                         mixup_layer=-1, l=1.0, shuffle_idx=None, mixup=None,
                         output_hidden_states=False, output_attentions=False):
    """Mirror of BertEncoder.forward. attention_mask: (B, S) with 1=keep, 0=mask."""
    B, S = attention_mask.shape
    add_mask = ((1.0 - attention_mask.astype(jnp.float32)) * -10000.0).reshape(B, 1, S)

    all_hidden_states = ()
    layer = 1
    for i, p in enumerate(layer_params):
        if output_hidden_states:
            all_hidden_states = all_hidden_states + (hidden_states,)
        # TODO(synk): per-layer head_mask[i] (head pruning) not applied inside
        # the kernel; default path passes None.
        # TODO(synk): cross-call weight prefetch (P10) / 2-layer fusion to hide
        # the per-layer weight DMA is not implemented; each layer is one call.
        hidden_states = bert_layer_forward(hidden_states, add_mask, p,
                                           num_heads=num_heads, eps=eps)
        if c_hidden_states is not None:
            c_hidden_states = lax.stop_gradient(
                bert_layer_forward(c_hidden_states, add_mask, p,
                                   num_heads=num_heads, eps=eps))
            if mixup_layer == layer and (mixup == 'word' or mixup == 'word_cls'):
                h_a, h_b = hidden_states, c_hidden_states[shuffle_idx]
                hidden_states = l * h_a + (1 - l) * h_b
                c_hidden_states = None
        layer += 1
    if output_hidden_states:
        all_hidden_states = all_hidden_states + (hidden_states,)
    outputs = (hidden_states,)
    if output_hidden_states:
        outputs = outputs + (all_hidden_states,)
    # TODO(synk): output_attentions not supported (kernel does not emit the
    # attention probability tensors).
    return outputs


# --------------------------- pure-JAX reference -------------------------------

def _ref_layer_norm(x, g, b, eps):
    mu = x.mean(-1, keepdims=True)
    var = ((x - mu) ** 2).mean(-1, keepdims=True)
    return (x - mu) / jnp.sqrt(var + eps) * g + b


def bert_encoder_ref(hidden_states, attention_mask, layer_params, *, num_heads, eps=1e-12):
    B, S, H = hidden_states.shape
    d = H // num_heads
    add_mask = (1.0 - attention_mask.astype(jnp.float32)) * -10000.0       # (B, S)
    x = hidden_states.astype(jnp.float32)
    for p in layer_params:
        q = x @ p["wq"] + p["bq"]
        k = x @ p["wk"] + p["bk"]
        v = x @ p["wv"] + p["bv"]
        qh = q.reshape(B, S, num_heads, d).transpose(0, 2, 1, 3)
        kh = k.reshape(B, S, num_heads, d).transpose(0, 2, 1, 3)
        vh = v.reshape(B, S, num_heads, d).transpose(0, 2, 1, 3)
        scores = jnp.einsum("bhqd,bhkd->bhqk", qh, kh) / math.sqrt(d)
        scores = scores + add_mask[:, None, None, :]
        probs = jax.nn.softmax(scores, axis=-1)
        ctx = jnp.einsum("bhqk,bhkd->bhqd", probs, vh)
        ctx = ctx.transpose(0, 2, 1, 3).reshape(B, S, H)
        attn = ctx @ p["wo"] + p["bo"]
        h1 = _ref_layer_norm(attn + x, p["ln1_g"], p["ln1_b"], eps)
        inter = _gelu_tanh(h1 @ p["wi"] + p["bi"])
        ffn = inter @ p["wo2"] + p["bo2"]
        x = _ref_layer_norm(ffn + h1, p["ln2_g"], p["ln2_b"], eps)
    return x


def init_layer_params(key, H, inter):
    ks = jax.random.split(key, 16)
    s = 0.05
    return {
        "wq": s * jax.random.normal(ks[0], (H, H), jnp.float32),
        "bq": s * jax.random.normal(ks[1], (H,), jnp.float32),
        "wk": s * jax.random.normal(ks[2], (H, H), jnp.float32),
        "bk": s * jax.random.normal(ks[3], (H,), jnp.float32),
        "wv": s * jax.random.normal(ks[4], (H, H), jnp.float32),
        "bv": s * jax.random.normal(ks[5], (H,), jnp.float32),
        "wo": s * jax.random.normal(ks[6], (H, H), jnp.float32),
        "bo": s * jax.random.normal(ks[7], (H,), jnp.float32),
        "ln1_g": 1.0 + 0.1 * jax.random.normal(ks[8], (H,), jnp.float32),
        "ln1_b": 0.1 * jax.random.normal(ks[9], (H,), jnp.float32),
        "wi": s * jax.random.normal(ks[10], (H, inter), jnp.float32),
        "bi": s * jax.random.normal(ks[11], (inter,), jnp.float32),
        "wo2": s * jax.random.normal(ks[12], (inter, H), jnp.float32),
        "bo2": s * jax.random.normal(ks[13], (H,), jnp.float32),
        "ln2_g": 1.0 + 0.1 * jax.random.normal(ks[14], (H,), jnp.float32),
        "ln2_b": 0.1 * jax.random.normal(ks[15], (H,), jnp.float32),
    }


if __name__ == "__main__":
    # Small config: batch=2, seq=8, hidden=32, heads=2 (head_dim=16),
    # intermediate=64, num_hidden_layers=2, eval mode.
    B, S, H, NH, INTER, L = 2, 8, 32, 2, 64, 2
    EPS = 1e-12

    key = jax.random.PRNGKey(0)
    k_h, k_unused, *k_layers = jax.random.split(key, 2 + L)
    params = [init_layer_params(k, H, INTER) for k in k_layers]

    hidden = 0.5 * jax.random.normal(k_h, (B, S, H), jnp.float32)
    attn_mask = jnp.ones((B, S), jnp.float32).at[1, S - 2:].set(0.0)  # mask 2 positions

    out = bert_encoder_forward(hidden, None, attn_mask, params,
                               num_heads=NH, eps=EPS)[0]
    out = jax.block_until_ready(out)

    ref = bert_encoder_ref(hidden, attn_mask, params, num_heads=NH, eps=EPS)
    assert out.shape == (B, S, H)
    # bf16 MXU inputs (f32 accumulation) vs pure-f32 reference: allow bf16-level error.
    assert jnp.allclose(out, ref, atol=2e-2, rtol=2e-2), "mismatch vs JAX reference"

    print("KERNEL_OK")
</pallas_src>

<mosaic_0001>
module attributes {stable_mosaic.version = 11 : i64} {
  func.func @_bert_layer_kernel(%arg0: i32, %arg1: i32, %arg2: memref<1x8x32xf32, #tpu.memory_space<vmem>>, %arg3: memref<1x8x32xf32, #tpu.memory_space<vmem>>, %arg4: memref<1x1x8xf32, #tpu.memory_space<vmem>>, %arg5: memref<32x32xbf16, #tpu.memory_space<vmem>>, %arg6: memref<1x32xf32, #tpu.memory_space<vmem>>, %arg7: memref<32x64xbf16, #tpu.memory_space<vmem>>, %arg8: memref<1x64xf32, #tpu.memory_space<vmem>>, %arg9: memref<32x32xbf16, #tpu.memory_space<vmem>>, %arg10: memref<1x32xf32, #tpu.memory_space<vmem>>, %arg11: memref<1x32xf32, #tpu.memory_space<vmem>>, %arg12: memref<1x32xf32, #tpu.memory_space<vmem>>, %arg13: memref<32x64xbf16, #tpu.memory_space<vmem>>, %arg14: memref<1x64xf32, #tpu.memory_space<vmem>>, %arg15: memref<64x32xbf16, #tpu.memory_space<vmem>>, %arg16: memref<1x32xf32, #tpu.memory_space<vmem>>, %arg17: memref<1x32xf32, #tpu.memory_space<vmem>>, %arg18: memref<1x32xf32, #tpu.memory_space<vmem>>, %arg19: memref<1x8x32xf32, #tpu.memory_space<vmem>>, %arg20: memref<8x64xbf16, #tpu.memory_space<vmem>>, %arg21: memref<8x32xf32, #tpu.memory_space<vmem>>) attributes {dimension_semantics = [#tpu.dimension_semantics<parallel>, #tpu.dimension_semantics<arbitrary>], iteration_bounds = array<i64: 2, 1>, scalar_prefetch = 0 : i64, scratch_operands = 2 : i64, tpu.core_type = #tpu.core_type<tc>, window_params = [{transform_indices = @transform_0, window_bounds = array<i64: 1, 8, 32>}, {transform_indices = @transform_1, window_bounds = array<i64: 1, 8, 32>}, {transform_indices = @transform_2, window_bounds = array<i64: 1, 1, 8>}, {pipeline_mode = #tpu.pipeline_mode<synchronous>, transform_indices = @transform_3, window_bounds = array<i64: 32, 32>}, {pipeline_mode = #tpu.pipeline_mode<synchronous>, transform_indices = @transform_4, window_bounds = array<i64: 1, 32>}, {pipeline_mode = #tpu.pipeline_mode<synchronous>, transform_indices = @transform_5, window_bounds = array<i64: 32, 64>}, {pipeline_mode = #tpu.pipeline_mode<synchronous>, transform_indices = @transform_6, window_bounds = array<i64: 1, 64>}, {pipeline_mode = #tpu.pipeline_mode<synchronous>, transform_indices = @transform_7, window_bounds = array<i64: 32, 32>}, {pipeline_mode = #tpu.pipeline_mode<synchronous>, transform_indices = @transform_8, window_bounds = array<i64: 1, 32>}, {pipeline_mode = #tpu.pipeline_mode<synchronous>, transform_indices = @transform_9, window_bounds = array<i64: 1, 32>}, {pipeline_mode = #tpu.pipeline_mode<synchronous>, transform_indices = @transform_10, window_bounds = array<i64: 1, 32>}, {pipeline_mode = #tpu.pipeline_mode<synchronous>, transform_indices = @transform_11, window_bounds = array<i64: 32, 64>}, {pipeline_mode = #tpu.pipeline_mode<synchronous>, transform_indices = @transform_12, window_bounds = array<i64: 1, 64>}, {pipeline_mode = #tpu.pipeline_mode<synchronous>, transform_indices = @transform_13, window_bounds = array<i64: 64, 32>}, {pipeline_mode = #tpu.pipeline_mode<synchronous>, transform_indices = @transform_14, window_bounds = array<i64: 1, 32>}, {pipeline_mode = #tpu.pipeline_mode<synchronous>, transform_indices = @transform_15, window_bounds = array<i64: 1, 32>}, {pipeline_mode = #tpu.pipeline_mode<synchronous>, transform_indices = @transform_16, window_bounds = array<i64: 1, 32>}, {transform_indices = @transform_17, window_bounds = array<i64: 1, 8, 32>}]} {
    %c0_i32 = arith.constant 0 : i32
    %0 = arith.cmpi eq, %arg1, %c0_i32 : i32
    %1 = arith.extui %0 : i1 to i32
    %c0_i32_0 = arith.constant 0 : i32
    %2 = arith.cmpi ne, %1, %c0_i32_0 : i32
    scf.if %2 {
      %c0_71 = arith.constant 0 : index
      %c0_72 = arith.constant 0 : index
      %c0_73 = arith.constant 0 : index
      %141 = vector.load %arg2[%c0_71, %c0_72, %c0_73] : memref<1x8x32xf32, #tpu.memory_space<vmem>>, vector<1x8x32xf32>
      %142 = vector.shape_cast %141 : vector<1x8x32xf32> to vector<8x32xf32>
      %143 = arith.truncf %142 : vector<8x32xf32> to vector<8x32xbf16>
      %c0_74 = arith.constant 0 : index
      %c0_75 = arith.constant 0 : index
      %144 = vector.load %arg7[%c0_74, %c0_75] : memref<32x64xbf16, #tpu.memory_space<vmem>>, vector<32x64xbf16>
      %cst_76 = arith.constant dense<0.000000e+00> : vector<8x64xf32>
      %145 = tpu.matmul %143, %144, %cst_76 {dimension_numbers = #tpu.dot_dimension_numbers<[1], [0], [0], [1], [0, 0, 1, 1], [], []>} : vector<8x32xbf16>, vector<32x64xbf16>, vector<8x64xf32> -> vector<8x64xf32>
      %c0_77 = arith.constant 0 : index
      %c0_78 = arith.constant 0 : index
      %146 = vector.load %arg8[%c0_77, %c0_78] : memref<1x64xf32, #tpu.memory_space<vmem>>, vector<1x64xf32>
      %147 = vector.broadcast %146 : vector<1x64xf32> to vector<8x64xf32>
      %148 = arith.addf %145, %147 : vector<8x64xf32>
      %149 = arith.truncf %148 : vector<8x64xf32> to vector<8x64xbf16>
      %c0_79 = arith.constant 0 : index
      %c0_80 = arith.constant 0 : index
      %150 = vector.load %arg20[%c0_79, %c0_80] : memref<8x64xbf16, #tpu.memory_space<vmem>>, vector<8x64xbf16>
      tpu.vector_store %arg20[%c0_79, %c0_80], %149 {strides = array<i32>} : memref<8x64xbf16, #tpu.memory_space<vmem>>, vector<8x64xbf16>,
    } else {
    }
    %c0 = arith.constant 0 : index
    %c0_1 = arith.constant 0 : index
    %c0_2 = arith.constant 0 : index
    %3 = vector.load %arg3[%c0, %c0_1, %c0_2] : memref<1x8x32xf32, #tpu.memory_space<vmem>>, vector<1x8x32xf32>
    %4 = vector.shape_cast %3 : vector<1x8x32xf32> to vector<8x32xf32>
    %c0_3 = arith.constant 0 : index
    %c0_4 = arith.constant 0 : index
    %c0_5 = arith.constant 0 : index
    %5 = vector.load %arg4[%c0_3, %c0_4, %c0_5] : memref<1x1x8xf32, #tpu.memory_space<vmem>>, vector<1x1x8xf32>
    %6 = vector.shape_cast %5 : vector<1x1x8xf32> to vector<1x8xf32>
    %7 = arith.truncf %4 : vector<8x32xf32> to vector<8x32xbf16>
    %c0_6 = arith.constant 0 : index
    %c0_7 = arith.constant 0 : index
    %8 = vector.load %arg5[%c0_6, %c0_7] : memref<32x32xbf16, #tpu.memory_space<vmem>>, vector<32x32xbf16>
    %cst = arith.constant dense<0.000000e+00> : vector<8x32xf32>
    %9 = tpu.matmul %7, %8, %cst {dimension_numbers = #tpu.dot_dimension_numbers<[1], [0], [0], [1], [0, 0, 1, 1], [], []>} : vector<8x32xbf16>, vector<32x32xbf16>, vector<8x32xf32> -> vector<8x32xf32>
    %c0_8 = arith.constant 0 : index
    %c0_9 = arith.constant 0 : index
    %10 = vector.load %arg6[%c0_8, %c0_9] : memref<1x32xf32, #tpu.memory_space<vmem>>, vector<1x32xf32>
    %11 = vector.broadcast %10 : vector<1x32xf32> to vector<8x32xf32>
    %12 = arith.addf %9, %11 : vector<8x32xf32>
    %13 = arith.truncf %12 : vector<8x32xf32> to vector<8x32xbf16>
    %14 = vector.extract_strided_slice %13 {offsets = [0, 0], sizes = [8, 16], strides = [1, 1]} : vector<8x32xbf16> to vector<8x16xbf16>
    %c0_10 = arith.constant 0 : index
    %c0_11 = arith.constant 0 : index
    %15 = vector.load %arg20[%c0_10, %c0_11] : memref<8x64xbf16, #tpu.memory_space<vmem>>, vector<8x16xbf16>
    %c0_12 = arith.constant 0 : index
    %c32 = arith.constant 32 : index
    %16 = vector.load %arg20[%c0_12, %c32] : memref<8x64xbf16, #tpu.memory_space<vmem>>, vector<8x16xbf16>
    %cst_13 = arith.constant dense<0.000000e+00> : vector<8x8xf32>
    %17 = tpu.matmul %14, %15, %cst_13 {dimension_numbers = #tpu.dot_dimension_numbers<[1], [1], [0], [0], [0, 0, 1, 0], [], []>} : vector<8x16xbf16>, vector<8x16xbf16>, vector<8x8xf32> -> vector<8x8xf32>
    %18 = vector.broadcast %6 : vector<1x8xf32> to vector<8x8xf32>
    %19 = arith.addf %17, %18 : vector<8x8xf32>
    %cst_14 = arith.constant dense<0xFF800000> : vector<8xf32>
    %20 = vector.multi_reduction <maximumf>, %19, %cst_14 [1] : vector<8x8xf32> to vector<8xf32>
    %21 = vector.shape_cast %20 : vector<8xf32> to vector<8x1xf32>
    %22 = vector.broadcast %21 : vector<8x1xf32> to vector<8x8xf32>
    %23 = arith.subf %19, %22 : vector<8x8xf32>
    %24 = math.exp %23 : vector<8x8xf32>
    %cst_15 = arith.constant dense<0.000000e+00> : vector<8xf32>
    %25 = vector.multi_reduction <add>, %24, %cst_15 [1] : vector<8x8xf32> to vector<8xf32>
    %26 = vector.shape_cast %25 : vector<8xf32> to vector<8x1xf32>
    %27 = tpu.reciprocal %26 {approx = true} : vector<8x1xf32> -> vector<8x1xf32>
    %28 = vector.broadcast %27 : vector<8x1xf32> to vector<8x8xf32>
    %29 = arith.mulf %24, %28 : vector<8x8xf32>
    %30 = arith.truncf %29 : vector<8x8xf32> to vector<8x8xbf16>
    %cst_16 = arith.constant dense<0.000000e+00> : vector<8x16xf32>
    %31 = tpu.matmul %30, %16, %cst_16 {dimension_numbers = #tpu.dot_dimension_numbers<[1], [0], [0], [1], [0, 0, 1, 1], [], []>} : vector<8x8xbf16>, vector<8x16xbf16>, vector<8x16xf32> -> vector<8x16xf32>
    %c0_17 = arith.constant 0 : index
    %c0_18 = arith.constant 0 : index
    %32 = vector.load %arg21[%c0_17, %c0_18] : memref<8x32xf32, #tpu.memory_space<vmem>>, vector<8x16xf32>
    tpu.vector_store %arg21[%c0_17, %c0_18], %31 {strides = array<i32>} : memref<8x32xf32, #tpu.memory_space<vmem>>, vector<8x16xf32>,
    %33 = vector.extract_strided_slice %13 {offsets = [0, 16], sizes = [8, 16], strides = [1, 1]} : vector<8x32xbf16> to vector<8x16xbf16>
    %c0_19 = arith.constant 0 : index
    %c16 = arith.constant 16 : index
    %34 = vector.load %arg20[%c0_19, %c16] : memref<8x64xbf16, #tpu.memory_space<vmem>>, vector<8x16xbf16>
    %c0_20 = arith.constant 0 : index
    %c48 = arith.constant 48 : index
    %35 = vector.load %arg20[%c0_20, %c48] : memref<8x64xbf16, #tpu.memory_space<vmem>>, vector<8x16xbf16>
    %cst_21 = arith.constant dense<0.000000e+00> : vector<8x8xf32>
    %36 = tpu.matmul %33, %34, %cst_21 {dimension_numbers = #tpu.dot_dimension_numbers<[1], [1], [0], [0], [0, 0, 1, 0], [], []>} : vector<8x16xbf16>, vector<8x16xbf16>, vector<8x8xf32> -> vector<8x8xf32>
    %37 = vector.broadcast %6 : vector<1x8xf32> to vector<8x8xf32>
    %38 = arith.addf %36, %37 : vector<8x8xf32>
    %cst_22 = arith.constant dense<0xFF800000> : vector<8xf32>
    %39 = vector.multi_reduction <maximumf>, %38, %cst_22 [1] : vector<8x8xf32> to vector<8xf32>
    %40 = vector.shape_cast %39 : vector<8xf32> to vector<8x1xf32>
    %41 = vector.broadcast %40 : vector<8x1xf32> to vector<8x8xf32>
    %42 = arith.subf %38, %41 : vector<8x8xf32>
    %43 = math.exp %42 : vector<8x8xf32>
    %cst_23 = arith.constant dense<0.000000e+00> : vector<8xf32>
    %44 = vector.multi_reduction <add>, %43, %cst_23 [1] : vector<8x8xf32> to vector<8xf32>
    %45 = vector.shape_cast %44 : vector<8xf32> to vector<8x1xf32>
    %46 = tpu.reciprocal %45 {approx = true} : vector<8x1xf32> -> vector<8x1xf32>
    %47 = vector.broadcast %46 : vector<8x1xf32> to vector<8x8xf32>
    %48 = arith.mulf %43, %47 : vector<8x8xf32>
    %49 = arith.truncf %48 : vector<8x8xf32> to vector<8x8xbf16>
    %cst_24 = arith.constant dense<0.000000e+00> : vector<8x16xf32>
    %50 = tpu.matmul %49, %35, %cst_24 {dimension_numbers = #tpu.dot_dimension_numbers<[1], [0], [0], [1], [0, 0, 1, 1], [], []>} : vector<8x8xbf16>, vector<8x16xbf16>, vector<8x16xf32> -> vector<8x16xf32>
    %c0_25 = arith.constant 0 : index
    %c16_26 = arith.constant 16 : index
    %51 = vector.load %arg21[%c0_25, %c16_26] : memref<8x32xf32, #tpu.memory_space<vmem>>, vector<8x16xf32>
    tpu.vector_store %arg21[%c0_25, %c16_26], %50 {strides = array<i32>} : memref<8x32xf32, #tpu.memory_space<vmem>>, vector<8x16xf32>,
    %c0_27 = arith.constant 0 : index
    %c0_28 = arith.constant 0 : index
    %52 = vector.load %arg21[%c0_27, %c0_28] : memref<8x32xf32, #tpu.memory_space<vmem>>, vector<8x32xf32>
    %53 = arith.truncf %52 : vector<8x32xf32> to vector<8x32xbf16>
    %c0_29 = arith.constant 0 : index
    %c0_30 = arith.constant 0 : index
    %54 = vector.load %arg9[%c0_29, %c0_30] : memref<32x32xbf16, #tpu.memory_space<vmem>>, vector<32x32xbf16>
    %cst_31 = arith.constant dense<0.000000e+00> : vector<8x32xf32>
    %55 = tpu.matmul %53, %54, %cst_31 {dimension_numbers = #tpu.dot_dimension_numbers<[1], [0], [0], [1], [0, 0, 1, 1], [], []>} : vector<8x32xbf16>, vector<32x32xbf16>, vector<8x32xf32> -> vector<8x32xf32>
    %c0_32 = arith.constant 0 : index
    %c0_33 = arith.constant 0 : index
    %56 = vector.load %arg10[%c0_32, %c0_33] : memref<1x32xf32, #tpu.memory_space<vmem>>, vector<1x32xf32>
    %57 = vector.broadcast %56 : vector<1x32xf32> to vector<8x32xf32>
    %58 = arith.addf %55, %57 : vector<8x32xf32>
    %59 = arith.addf %58, %4 : vector<8x32xf32>
    %c0_34 = arith.constant 0 : index
    %c0_35 = arith.constant 0 : index
    %60 = vector.load %arg11[%c0_34, %c0_35] : memref<1x32xf32, #tpu.memory_space<vmem>>, vector<1x32xf32>
    %c0_36 = arith.constant 0 : index
    %c0_37 = arith.constant 0 : index
    %61 = vector.load %arg12[%c0_36, %c0_37] : memref<1x32xf32, #tpu.memory_space<vmem>>, vector<1x32xf32>
    %cst_38 = arith.constant dense<0.000000e+00> : vector<8xf32>
    %62 = vector.multi_reduction <add>, %59, %cst_38 [1] : vector<8x32xf32> to vector<8xf32>
    %63 = vector.shape_cast %62 : vector<8xf32> to vector<8x1xf32>
    %64 = arith.mulf %59, %59 : vector<8x32xf32>
    %cst_39 = arith.constant dense<0.000000e+00> : vector<8xf32>
    %65 = vector.multi_reduction <add>, %64, %cst_39 [1] : vector<8x32xf32> to vector<8xf32>
    %66 = vector.shape_cast %65 : vector<8xf32> to vector<8x1xf32>
    %cst_40 = arith.constant 3.125000e-02 : f32
    %67 = vector.broadcast %cst_40 : f32 to vector<8x1xf32>
    %68 = arith.mulf %63, %67 : vector<8x1xf32>
    %cst_41 = arith.constant 3.125000e-02 : f32
    %69 = vector.broadcast %cst_41 : f32 to vector<8x1xf32>
    %70 = arith.mulf %66, %69 : vector<8x1xf32>
    %71 = arith.mulf %68, %68 : vector<8x1xf32>
    %72 = arith.subf %70, %71 : vector<8x1xf32>
    %cst_42 = arith.constant 0.000000e+00 : f32
    %73 = vector.broadcast %cst_42 : f32 to vector<8x1xf32>
    %74 = arith.maximumf %72, %73 : vector<8x1xf32>
    %75 = vector.broadcast %68 : vector<8x1xf32> to vector<8x32xf32>
    %76 = arith.subf %59, %75 : vector<8x32xf32>
    %cst_43 = arith.constant 9.99999996E-13 : f32
    %77 = vector.broadcast %cst_43 : f32 to vector<8x1xf32>
    %78 = arith.addf %74, %77 : vector<8x1xf32>
    %79 = math.rsqrt %78 : vector<8x1xf32>
    %80 = vector.broadcast %79 : vector<8x1xf32> to vector<8x32xf32>
    %81 = arith.mulf %76, %80 : vector<8x32xf32>
    %82 = vector.broadcast %60 : vector<1x32xf32> to vector<8x32xf32>
    %83 = arith.mulf %81, %82 : vector<8x32xf32>
    %84 = vector.broadcast %61 : vector<1x32xf32> to vector<8x32xf32>
    %85 = arith.addf %83, %84 : vector<8x32xf32>
    %86 = arith.truncf %85 : vector<8x32xf32> to vector<8x32xbf16>
    %c0_44 = arith.constant 0 : index
    %c0_45 = arith.constant 0 : index
    %87 = vector.load %arg13[%c0_44, %c0_45] : memref<32x64xbf16, #tpu.memory_space<vmem>>, vector<32x64xbf16>
    %cst_46 = arith.constant dense<0.000000e+00> : vector<8x64xf32>
    %88 = tpu.matmul %86, %87, %cst_46 {dimension_numbers = #tpu.dot_dimension_numbers<[1], [0], [0], [1], [0, 0, 1, 1], [], []>} : vector<8x32xbf16>, vector<32x64xbf16>, vector<8x64xf32> -> vector<8x64xf32>
    %c0_47 = arith.constant 0 : index
    %c0_48 = arith.constant 0 : index
    %89 = vector.load %arg14[%c0_47, %c0_48] : memref<1x64xf32, #tpu.memory_space<vmem>>, vector<1x64xf32>
    %90 = vector.broadcast %89 : vector<1x64xf32> to vector<8x64xf32>
    %91 = arith.addf %88, %90 : vector<8x64xf32>
    %cst_49 = arith.constant 5.000000e-01 : f32
    %92 = vector.broadcast %cst_49 : f32 to vector<8x64xf32>
    %93 = arith.mulf %92, %91 : vector<8x64xf32>
    %cst_50 = arith.constant 4.471500e-02 : f32
    %94 = vector.broadcast %cst_50 : f32 to vector<8x64xf32>
    %95 = arith.mulf %94, %91 : vector<8x64xf32>
    %96 = arith.mulf %95, %91 : vector<8x64xf32>
    %97 = arith.mulf %96, %91 : vector<8x64xf32>
    %98 = arith.addf %91, %97 : vector<8x64xf32>
    %cst_51 = arith.constant 0.797884583 : f32
    %99 = vector.broadcast %cst_51 : f32 to vector<8x64xf32>
    %100 = arith.mulf %99, %98 : vector<8x64xf32>
    %101 = math.tanh %100 : vector<8x64xf32>
    %cst_52 = arith.constant 1.000000e+00 : f32
    %102 = vector.broadcast %cst_52 : f32 to vector<8x64xf32>
    %103 = arith.addf %102, %101 : vector<8x64xf32>
    %104 = arith.mulf %93, %103 : vector<8x64xf32>
    %105 = arith.truncf %104 : vector<8x64xf32> to vector<8x64xbf16>
    %c0_53 = arith.constant 0 : index
    %c0_54 = arith.constant 0 : index
    %106 = vector.load %arg15[%c0_53, %c0_54] : memref<64x32xbf16, #tpu.memory_space<vmem>>, vector<64x32xbf16>
    %cst_55 = arith.constant dense<0.000000e+00> : vector<8x32xf32>
    %107 = tpu.matmul %105, %106, %cst_55 {dimension_numbers = #tpu.dot_dimension_numbers<[1], [0], [0], [1], [0, 0, 1, 1], [], []>} : vector<8x64xbf16>, vector<64x32xbf16>, vector<8x32xf32> -> vector<8x32xf32>
    %c0_56 = arith.constant 0 : index
    %c0_57 = arith.constant 0 : index
    %108 = vector.load %arg16[%c0_56, %c0_57] : memref<1x32xf32, #tpu.memory_space<vmem>>, vector<1x32xf32>
    %109 = vector.broadcast %108 : vector<1x32xf32> to vector<8x32xf32>
    %110 = arith.addf %107, %109 : vector<8x32xf32>
    %111 = arith.addf %110, %85 : vector<8x32xf32>
    %c0_58 = arith.constant 0 : index
    %c0_59 = arith.constant 0 : index
    %112 = vector.load %arg17[%c0_58, %c0_59] : memref<1x32xf32, #tpu.memory_space<vmem>>, vector<1x32xf32>
    %c0_60 = arith.constant 0 : index
    %c0_61 = arith.constant 0 : index
    %113 = vector.load %arg18[%c0_60, %c0_61] : memref<1x32xf32, #tpu.memory_space<vmem>>, vector<1x32xf32>
    %cst_62 = arith.constant dense<0.000000e+00> : vector<8xf32>
    %114 = vector.multi_reduction <add>, %111, %cst_62 [1] : vector<8x32xf32> to vector<8xf32>
    %115 = vector.shape_cast %114 : vector<8xf32> to vector<8x1xf32>
    %116 = arith.mulf %111, %111 : vector<8x32xf32>
    %cst_63 = arith.constant dense<0.000000e+00> : vector<8xf32>
    %117 = vector.multi_reduction <add>, %116, %cst_63 [1] : vector<8x32xf32> to vector<8xf32>
    %118 = vector.shape_cast %117 : vector<8xf32> to vector<8x1xf32>
    %cst_64 = arith.constant 3.125000e-02 : f32
    %119 = vector.broadcast %cst_64 : f32 to vector<8x1xf32>
    %120 = arith.mulf %115, %119 : vector<8x1xf32>
    %cst_65 = arith.constant 3.125000e-02 : f32
    %121 = vector.broadcast %cst_65 : f32 to vector<8x1xf32>
    %122 = arith.mulf %118, %121 : vector<8x1xf32>
    %123 = arith.mulf %120, %120 : vector<8x1xf32>
    %124 = arith.subf %122, %123 : vector<8x1xf32>
    %cst_66 = arith.constant 0.000000e+00 : f32
    %125 = vector.broadcast %cst_66 : f32 to vector<8x1xf32>
    %126 = arith.maximumf %124, %125 : vector<8x1xf32>
    %127 = vector.broadcast %120 : vector<8x1xf32> to vector<8x32xf32>
    %128 = arith.subf %111, %127 : vector<8x32xf32>
    %cst_67 = arith.constant 9.99999996E-13 : f32
    %129 = vector.broadcast %cst_67 : f32 to vector<8x1xf32>
    %130 = arith.addf %126, %129 : vector<8x1xf32>
    %131 = math.rsqrt %130 : vector<8x1xf32>
    %132 = vector.broadcast %131 : vector<8x1xf32> to vector<8x32xf32>
    %133 = arith.mulf %128, %132 : vector<8x32xf32>
    %134 = vector.broadcast %112 : vector<1x32xf32> to vector<8x32xf32>
    %135 = arith.mulf %133, %134 : vector<8x32xf32>
    %136 = vector.broadcast %113 : vector<1x32xf32> to vector<8x32xf32>
    %137 = arith.addf %135, %136 : vector<8x32xf32>
    %c0_68 = arith.constant 0 : index
    %c0_69 = arith.constant 0 : index
    %c0_70 = arith.constant 0 : index
    %138 = vector.load %arg19[%c0_68, %c0_69, %c0_70] : memref<1x8x32xf32, #tpu.memory_space<vmem>>, vector<1x8x32xf32>
    %139 = vector.shape_cast %138 : vector<1x8x32xf32> to vector<8x32xf32>
    %140 = vector.shape_cast %137 : vector<8x32xf32> to vector<1x8x32xf32>
    tpu.vector_store %arg19[%c0_68, %c0_69, %c0_70], %140 {strides = array<i32>} : memref<1x8x32xf32, #tpu.memory_space<vmem>>, vector<1x8x32xf32>,
    return
  }
  func.func @transform_0(%arg0: i32, %arg1: i32) -> (i32, i32, i32) {
    %c0_i32 = arith.constant 0 : i32
    %c0_i32_0 = arith.constant 0 : i32
    %c0_i32_1 = arith.constant 0 : i32
    return %arg0, %c0_i32, %c0_i32_0 : i32, i32, i32
  }
  func.func @transform_1(%arg0: i32, %arg1: i32) -> (i32, i32, i32) {
    %c0_i32 = arith.constant 0 : i32
    %c0_i32_0 = arith.constant 0 : i32
    return %arg0, %arg1, %c0_i32 : i32, i32, i32
  }
  func.func @transform_2(%arg0: i32, %arg1: i32) -> (i32, i32, i32) {
    %c0_i32 = arith.constant 0 : i32
    %c0_i32_0 = arith.constant 0 : i32
    %c0_i32_1 = arith.constant 0 : i32
    return %arg0, %c0_i32, %c0_i32_0 : i32, i32, i32
  }
  func.func @transform_3(%arg0: i32, %arg1: i32) -> (i32, i32) {
    %c0_i32 = arith.constant 0 : i32
    %c0_i32_0 = arith.constant 0 : i32
    %c0_i32_1 = arith.constant 0 : i32
    return %c0_i32, %c0_i32_0 : i32, i32
  }
  func.func @transform_4(%arg0: i32, %arg1: i32) -> (i32, i32) {
    %c0_i32 = arith.constant 0 : i32
    %c0_i32_0 = arith.constant 0 : i32
    %c0_i32_1 = arith.constant 0 : i32
    return %c0_i32, %c0_i32_0 : i32, i32
  }
  func.func @transform_5(%arg0: i32, %arg1: i32) -> (i32, i32) {
    %c0_i32 = arith.constant 0 : i32
    %c0_i32_0 = arith.constant 0 : i32
    %c0_i32_1 = arith.constant 0 : i32
    return %c0_i32, %c0_i32_0 : i32, i32
  }
  func.func @transform_6(%arg0: i32, %arg1: i32) -> (i32, i32) {
    %c0_i32 = arith.constant 0 : i32
    %c0_i32_0 = arith.constant 0 : i32
    %c0_i32_1 = arith.constant 0 : i32
    return %c0_i32, %c0_i32_0 : i32, i32
  }
  func.func @transform_7(%arg0: i32, %arg1: i32) -> (i32, i32) {
    %c0_i32 = arith.constant 0 : i32
    %c0_i32_0 = arith.constant 0 : i32
    %c0_i32_1 = arith.constant 0 : i32
    return %c0_i32, %c0_i32_0 : i32, i32
  }
  func.func @transform_8(%arg0: i32, %arg1: i32) -> (i32, i32) {
    %c0_i32 = arith.constant 0 : i32
    %c0_i32_0 = arith.constant 0 : i32
    %c0_i32_1 = arith.constant 0 : i32
    return %c0_i32, %c0_i32_0 : i32, i32
  }
  func.func @transform_9(%arg0: i32, %arg1: i32) -> (i32, i32) {
    %c0_i32 = arith.constant 0 : i32
    %c0_i32_0 = arith.constant 0 : i32
    %c0_i32_1 = arith.constant 0 : i32
    return %c0_i32, %c0_i32_0 : i32, i32
  }
  func.func @transform_10(%arg0: i32, %arg1: i32) -> (i32, i32) {
    %c0_i32 = arith.constant 0 : i32
    %c0_i32_0 = arith.constant 0 : i32
    %c0_i32_1 = arith.constant 0 : i32
    return %c0_i32, %c0_i32_0 : i32, i32
  }
  func.func @transform_11(%arg0: i32, %arg1: i32) -> (i32, i32) {
    %c0_i32 = arith.constant 0 : i32
    %c0_i32_0 = arith.constant 0 : i32
    %c0_i32_1 = arith.constant 0 : i32
    return %c0_i32, %c0_i32_0 : i32, i32
  }
  func.func @transform_12(%arg0: i32, %arg1: i32) -> (i32, i32) {
    %c0_i32 = arith.constant 0 : i32
    %c0_i32_0 = arith.constant 0 : i32
    %c0_i32_1 = arith.constant 0 : i32
    return %c0_i32, %c0_i32_0 : i32, i32
  }
  func.func @transform_13(%arg0: i32, %arg1: i32) -> (i32, i32) {
    %c0_i32 = arith.constant 0 : i32
    %c0_i32_0 = arith.constant 0 : i32
    %c0_i32_1 = arith.constant 0 : i32
    return %c0_i32, %c0_i32_0 : i32, i32
  }
  func.func @transform_14(%arg0: i32, %arg1: i32) -> (i32, i32) {
    %c0_i32 = arith.constant 0 : i32
    %c0_i32_0 = arith.constant 0 : i32
    %c0_i32_1 = arith.constant 0 : i32
    return %c0_i32, %c0_i32_0 : i32, i32
  }
  func.func @transform_15(%arg0: i32, %arg1: i32) -> (i32, i32) {
    %c0_i32 = arith.constant 0 : i32
    %c0_i32_0 = arith.constant 0 : i32
    %c0_i32_1 = arith.constant 0 : i32
    return %c0_i32, %c0_i32_0 : i32, i32
  }
  func.func @transform_16(%arg0: i32, %arg1: i32) -> (i32, i32) {
    %c0_i32 = arith.constant 0 : i32
    %c0_i32_0 = arith.constant 0 : i32
    %c0_i32_1 = arith.constant 0 : i32
    return %c0_i32, %c0_i32_0 : i32, i32
  }
  func.func @transform_17(%arg0: i32, %arg1: i32) -> (i32, i32, i32) {
    %c0_i32 = arith.constant 0 : i32
    %c0_i32_0 = arith.constant 0 : i32
    return %arg0, %arg1, %c0_i32 : i32, i32, i32
  }
}

</mosaic_0001>

<llo_original>
// kernel: tpu_custom_call.1
$region0: #{tpu_custom_call.1}
  #allocation0 [shape = 'u32[]', space=smem, size = 0x4, offset = 0x4, fixed_abs, tag = 'smem constant byte address 0x4 - core index']
  #allocation1 [shape = 'u32[144,128]{1,0:T(1,128)}', space=vmem, size = 0x12000, scoped, tag = 'internal scratch']
  #allocation2 [shape = 'bf16[8,64]{1,0:T(8,128)(2,1)}', space=vmem, size = 0x800, scoped, tag = 'scratch operand']
  #allocation3 [shape = 'f32[8,32]{1,0:T(8,128)}', space=vmem, size = 0x1000, scoped, tag = 'scratch operand']
  %s0 = inlined_call_operand.vmem [shape: f32[2,8,32], index: 0, kind: input, shape index: {}]
  %s1 = inlined_call_operand.vmem [shape: f32[2,8,32], index: 1, kind: input, shape index: {}]
  %s2 = inlined_call_operand.vmem [shape: f32[2,1,8], index: 2, kind: input, shape index: {}]
  %s3 = inlined_call_operand.vmem [shape: bf16[32,32], index: 3, kind: input, shape index: {}]
  %s4 = inlined_call_operand.hbm [shape: f32[1,32], index: 4, kind: input, shape index: {}]
  %s5 = inlined_call_operand.hbm [shape: bf16[32,64], index: 5, kind: input, shape index: {}]
  %s6 = inlined_call_operand.hbm [shape: f32[1,64], index: 6, kind: input, shape index: {}]
  %s7 = inlined_call_operand.hbm [shape: bf16[32,32], index: 7, kind: input, shape index: {}]
  %s8 = inlined_call_operand.hbm [shape: f32[1,32], index: 8, kind: input, shape index: {}]
  %s9 = inlined_call_operand.hbm [shape: f32[1,32], index: 9, kind: input, shape index: {}]
  %s10 = inlined_call_operand.vmem [shape: f32[1,32], index: 10, kind: input, shape index: {}]
  %s11 = inlined_call_operand.vmem [shape: bf16[32,64], index: 11, kind: input, shape index: {}]
  %s12 = inlined_call_operand.vmem [shape: f32[1,64], index: 12, kind: input, shape index: {}]
  %s13 = inlined_call_operand.vmem [shape: bf16[64,32], index: 13, kind: input, shape index: {}]
  %s14 = inlined_call_operand.vmem [shape: f32[1,32], index: 14, kind: input, shape index: {}]
  %s15 = inlined_call_operand.vmem [shape: f32[1,32], index: 15, kind: input, shape index: {}]
  %s16 = inlined_call_operand.vmem [shape: f32[1,32], index: 16, kind: input, shape index: {}]
  %s17 = inlined_call_operand.hbm [shape: f32[2,8,32], index: 17, kind: output, shape index: {}]
  %s18 = sld [smem:[#allocation0]]
  $region129: #{tpu_custom_call.1} parent=0
    _
  %s20 = ssub.s32 1, %s18
  %s21 = scalar_select 0, %s20, %s18
  $region1: #{tpu_custom_call.1} parent=0
    #allocation4 [shape = 'u8[512]{0}', space=vmem, size = 0x400, scoped, tag = 'input window, operand 4, single buffered']
    #allocation5 [shape = 's32[2]{0}', space=sflag, size = 0x8, scoped, tag = 'scoped memory for tpu_custom_call.1']
    #allocation6 [shape = 's32[2]{0}', space=sflag, size = 0x8, scoped, tag = 'scoped memory for tpu_custom_call.1']
    #allocation7 [shape = 'u8[8192]{0}', space=vmem, size = 0x2000, scoped, tag = 'input window, operand 5, single buffered']
    #allocation8 [shape = 's32[1]{0}', space=sflag, size = 0x4, scoped, tag = 'scoped memory for tpu_custom_call.1']
    #allocation9 [shape = 'u8[512]{0}', space=vmem, size = 0x400, scoped, tag = 'input window, operand 6, single buffered']
    #allocation10 [shape = 'u8[8192]{0}', space=vmem, size = 0x2000, scoped, tag = 'input window, operand 7, single buffered']
    #allocation11 [shape = 's32[1]{0}', space=sflag, size = 0x4, scoped, tag = 'scoped memory for tpu_custom_call.1']
    #allocation12 [shape = 'u8[512]{0}', space=vmem, size = 0x400, scoped, tag = 'input window, operand 8, single buffered']
    #allocation13 [shape = 'u8[512]{0}', space=vmem, size = 0x400, scoped, tag = 'input window, operand 9, single buffered']
    #allocation14 [shape = 's32[1]{0}', space=sflag, size = 0x4, scoped, tag = 'scoped memory for tpu_custom_call.1']
    #allocation15 [shape = 'u8[8192]{0}', space=vmem, size = 0x2000, scoped, tag = 'output window, operand 0']
    %22 = vsyncpa [#allocation5], 0
    %23 = vsyncpa [#allocation8], 0
    %24 = vsyncpa [#allocation11], 0
    %25 = vsyncpa [#allocation14], 0
    %26 = vsyncpa [#allocation6], 0
    %s27 = scalar_lea.sflag [#allocation6], 1
    %28 = vsyncpa %s27, 0
    loop: start=0, step=1, limit=4
    $region2: #{tpu_custom_call.1} parent=1 // loop_pre_header
      _
    $region3: #{tpu_custom_call.1} parent=1 // loop_header
      %s30 = sphi 0, %s34
      %p31 = scmp.ge.s32.totalorder %s30, 4
      %s37 = sphi 0, %s49
      %s38 = sphi 0, %s45
      %s39 = sphi 0, %s37
      %s40 = sphi 0, %s38
      %s41 = sphi 0, %s39
      %s42 = sphi 0, %s40
      %s52 = sphi 0, %s54
      %s55 = sphi 0, %s52
      %s56 = sphi 0, %s55
      %s72 = sphi 0, %s56
      %s80 = sphi 0, %s82
      %s83 = sphi 0, %s80
      %s84 = sphi 0, %s83
      %s100 = sphi 0, %s84
      %s106 = sphi 0, %s108
      %s109 = sphi 0, %s106
      %s110 = sphi 0, %s109
      %s126 = sphi 0, %s110
      %s130 = sphi 0, %s130
      %s132 = sphi 0, %s130
      %s133 = sphi 0, %s132
      %s147 = sphi 0, %s133
      %s151 = sphi 0, %s151
      %s153 = sphi 0, %s151
      %s154 = sphi 0, %s153
      %s168 = sphi 0, %s154
      %s172 = sphi 0, %s172
      %s174 = sphi 0, %s172
      %s175 = sphi 0, %s174
      %s189 = sphi 0, %s175
      %s193 = sphi 0, %s193
      %s195 = sphi 0, %s193
      %s196 = sphi 0, %s195
      %s210 = sphi 0, %s196
      %s214 = sphi 0, %s214
      %s216 = sphi 0, %s214
      %s217 = sphi 0, %s216
      %s231 = sphi 0, %s217
      %s235 = sphi 0, %s235
      %s237 = sphi 0, %s235
      %s238 = sphi 0, %s237
      %s252 = sphi 0, %s238
      %s256 = sphi 0, %s256
      %s258 = sphi 0, %s256
      %s259 = sphi 0, %s258
      %s273 = sphi 0, %s259
      %s277 = sphi 0, %s277
      %s279 = sphi 0, %s277
      %s280 = sphi 0, %s279
      %s294 = sphi 0, %s280
      %s298 = sphi 0, %s298
      %s300 = sphi 0, %s298
      %s301 = sphi 0, %s300
      %s315 = sphi 0, %s301
      %s319 = sphi 0, %s319
      %s321 = sphi 0, %s319
      %s322 = sphi 0, %s321
      %s336 = sphi 0, %s322
      %s340 = sphi 0, %s340
      %s342 = sphi 0, %s340
      %s343 = sphi 0, %s342
      %s357 = sphi 0, %s343
      %s361 = sphi 0, %s361
      %s363 = sphi 0, %s361
      %s364 = sphi 0, %s363
      %s378 = sphi 0, %s364
      %s382 = sphi 0, %s382
      %s384 = sphi 0, %s382
      %s385 = sphi 0, %s384
      %s399 = sphi 0, %s385
      %s403 = sphi 0, %s403
      %s405 = sphi 0, %s403
      %s406 = sphi 0, %s405
      %s420 = sphi 0, %s406
      %s428 = sphi 0, %s430
      %s431 = sphi 0, %s428
      %s432 = sphi 0, %s431
      %s448 = sphi 0, %s432
    $region4: #{tpu_custom_call.1} parent=1 // loop_header_branch
      %33 = sbr.rel (%p31) target = $region8
    $region5: #{tpu_custom_call.1} parent=1 // loop_body
      %s35 = ssub.s32 %s30, 1
      %s36 = ssub.s32 %s30, 2
      %s43 = sadd.s32 1, %s38
      %p44 = scmp.ge.s32.totalorder %s43, 1
      %s45 = scalar_select %p44, 0, %s43
      %s46 = sadd.s32 1, %s37
      %s47 = scalar_select %p44, %s46, %s37
      %p48 = scmp.ge.s32.totalorder %s47, 2
      %s49 = scalar_select %p48, 0, %s47
      %s50 = ssub.s32 %s37, %s49
      %p51 = scmp.eq.s32.totalorder %s50, 0
      %s53 = sadd.s32 %s52, 1
      %s54 = scalar_select %p51, %s52, %s53
      %p57 = pneg %p51
      %p58 = scmp.eq.s32.totalorder %s30, 1
      %p59 = por %p57, %p58
      %p60 = scmp.ne.s32.totalorder %s52, %s55
      %p61 = scmp.eq.s32.totalorder %s30, 0
      %p62 = por %p60, %p61
      %p63 = scmp.ne.s32.totalorder %s52, %s55
      %p64 = scmp.eq.s32.totalorder %s35, 1
      %p65 = por %p63, %p64
      %p66 = scmp.ne.s32.totalorder %s55, %s56
      %p67 = scmp.eq.s32.totalorder %s35, 0
      %p68 = por %p66, %p67
      %p69 = scmp.ne.s32.totalorder %s55, %s56
      %p70 = scmp.eq.s32.totalorder %s36, 1
      %p71 = por %p69, %p70
      %p73 = scmp.ne.s32.totalorder %s56, %s72
      %p74 = scmp.eq.s32.totalorder %s36, 0
      %p75 = por %p73, %p74
      %s76 = ssub.s32 %s37, %s49
      %s77 = ssub.s32 %s38, %s45
      %s78 = sor.u32 %s76, %s77
      %p79 = scmp.eq.s32.totalorder %s78, 0
      %s81 = sadd.s32 %s80, 1
      %s82 = scalar_select %p79, %s80, %s81
      %p85 = pneg %p79
      %p86 = scmp.eq.s32.totalorder %s30, 1
      %p87 = por %p85, %p86
      %p88 = scmp.ne.s32.totalorder %s80, %s83
      %p89 = scmp.eq.s32.totalorder %s30, 0
      %p90 = por %p88, %p89
      %p91 = scmp.ne.s32.totalorder %s80, %s83
      %p92 = scmp.eq.s32.totalorder %s35, 1
      %p93 = por %p91, %p92
      %p94 = scmp.ne.s32.totalorder %s83, %s84
      %p95 = scmp.eq.s32.totalorder %s35, 0
      %p96 = por %p94, %p95
      %p97 = scmp.ne.s32.totalorder %s83, %s84
      %p98 = scmp.eq.s32.totalorder %s36, 1
      %p99 = por %p97, %p98
      %p101 = scmp.ne.s32.totalorder %s84, %s100
      %p102 = scmp.eq.s32.totalorder %s36, 0
      %p103 = por %p101, %p102
      %s104 = ssub.s32 %s37, %s49
      %p105 = scmp.eq.s32.totalorder %s104, 0
      %s107 = sadd.s32 %s106, 1
      %s108 = scalar_select %p105, %s106, %s107
      %p111 = pneg %p105
      %p112 = scmp.eq.s32.totalorder %s30, 1
      %p113 = por %p111, %p112
      %p114 = scmp.ne.s32.totalorder %s106, %s109
      %p115 = scmp.eq.s32.totalorder %s30, 0
      %p116 = por %p114, %p115
      %p117 = scmp.ne.s32.totalorder %s106, %s109
      %p118 = scmp.eq.s32.totalorder %s35, 1
      %p119 = por %p117, %p118
      %p120 = scmp.ne.s32.totalorder %s109, %s110
      %p121 = scmp.eq.s32.totalorder %s35, 0
      %p122 = por %p120, %p121
      %p123 = scmp.ne.s32.totalorder %s109, %s110
      %p124 = scmp.eq.s32.totalorder %s36, 1
      %p125 = por %p123, %p124
      %p127 = scmp.ne.s32.totalorder %s110, %s126
      %p128 = scmp.eq.s32.totalorder %s36, 0
      %p129 = por %p127, %p128
      %s131 = sadd.s32 %s130, 1
      %p134 = scmp.eq.s32.totalorder %s30, 1
      %p135 = scmp.ne.s32.totalorder %s130, %s132
      %p136 = scmp.eq.s32.totalorder %s30, 0
      %p137 = por %p135, %p136
      %p138 = scmp.ne.s32.totalorder %s130, %s132
      %p139 = scmp.eq.s32.totalorder %s35, 1
      %p140 = por %p138, %p139
      %p141 = scmp.ne.s32.totalorder %s132, %s133
      %p142 = scmp.eq.s32.totalorder %s35, 0
      %p143 = por %p141, %p142
      %p144 = scmp.ne.s32.totalorder %s132, %s133
      %p145 = scmp.eq.s32.totalorder %s36, 1
      %p146 = por %p144, %p145
      %p148 = scmp.ne.s32.totalorder %s133, %s147
      %p149 = scmp.eq.s32.totalorder %s36, 0
      %p150 = por %p148, %p149
      %s152 = sadd.s32 %s151, 1
      %p155 = scmp.eq.s32.totalorder %s30, 1
      %p156 = scmp.ne.s32.totalorder %s151, %s153
      %p157 = scmp.eq.s32.totalorder %s30, 0
      %p158 = por %p156, %p157
      %p159 = scmp.ne.s32.totalorder %s151, %s153
      %p160 = scmp.eq.s32.totalorder %s35, 1
      %p161 = por %p159, %p160
      %p162 = scmp.ne.s32.totalorder %s153, %s154
      %p163 = scmp.eq.s32.totalorder %s35, 0
      %p164 = por %p162, %p163
      %p165 = scmp.ne.s32.totalorder %s153, %s154
      %p166 = scmp.eq.s32.totalorder %s36, 1
      %p167 = por %p165, %p166
      %p169 = scmp.ne.s32.totalorder %s154, %s168
      %p170 = scmp.eq.s32.totalorder %s36, 0
      %p171 = por %p169, %p170
      %s173 = sadd.s32 %s172, 1
      %p176 = scmp.eq.s32.totalorder %s30, 1
      %p177 = scmp.ne.s32.totalorder %s172, %s174
      %p178 = scmp.eq.s32.totalorder %s30, 0
      %p179 = por %p177, %p178
      %p180 = scmp.ne.s32.totalorder %s172, %s174
      %p181 = scmp.eq.s32.totalorder %s35, 1
      %p182 = por %p180, %p181
      %p183 = scmp.ne.s32.totalorder %s174, %s175
      %p184 = scmp.eq.s32.totalorder %s35, 0
      %p185 = por %p183, %p184
      %p186 = scmp.ne.s32.totalorder %s174, %s175
      %p187 = scmp.eq.s32.totalorder %s36, 1
      %p188 = por %p186, %p187
      %p190 = scmp.ne.s32.totalorder %s175, %s189
      %p191 = scmp.eq.s32.totalorder %s36, 0
      %p192 = por %p190, %p191
      %s194 = sadd.s32 %s193, 1
      %p197 = scmp.eq.s32.totalorder %s30, 1
      %p198 = scmp.ne.s32.totalorder %s193, %s195
      %p199 = scmp.eq.s32.totalorder %s30, 0
      %p200 = por %p198, %p199
      %p201 = scmp.ne.s32.totalorder %s193, %s195
      %p202 = scmp.eq.s32.totalorder %s35, 1
      %p203 = por %p201, %p202
      %p204 = scmp.ne.s32.totalorder %s195, %s196
      %p205 = scmp.eq.s32.totalorder %s35, 0
      %p206 = por %p204, %p205
      %p207 = scmp.ne.s32.totalorder %s195, %s196
      %p208 = scmp.eq.s32.totalorder %s36, 1
      %p209 = por %p207, %p208
      %p211 = scmp.ne.s32.totalorder %s196, %s210
      %p212 = scmp.eq.s32.totalorder %s36, 0
      %p213 = por %p211, %p212
      %s215 = sadd.s32 %s214, 1
      %p218 = scmp.eq.s32.totalorder %s30, 1
      %p219 = scmp.ne.s32.totalorder %s214, %s216
      %p220 = scmp.eq.s32.totalorder %s30, 0
      %p221 = por %p219, %p220
      %p222 = scmp.ne.s32.totalorder %s214, %s216
      %p223 = scmp.eq.s32.totalorder %s35, 1
      %p224 = por %p222, %p223
      %p225 = scmp.ne.s32.totalorder %s216, %s217
      %p226 = scmp.eq.s32.totalorder %s35, 0
      %p227 = por %p225, %p226
      %p228 = scmp.ne.s32.totalorder %s216, %s217
      %p229 = scmp.eq.s32.totalorder %s36, 1
      %p230 = por %p228, %p229
      %p232 = scmp.ne.s32.totalorder %s217, %s231
      %p233 = scmp.eq.s32.totalorder %s36, 0
      %p234 = por %p232, %p233
      %s236 = sadd.s32 %s235, 1
      %p239 = scmp.eq.s32.totalorder %s30, 1
      %p240 = scmp.ne.s32.totalorder %s235, %s237
      %p241 = scmp.eq.s32.totalorder %s30, 0
      %p242 = por %p240, %p241
      %p243 = scmp.ne.s32.totalorder %s235, %s237
      %p244 = scmp.eq.s32.totalorder %s35, 1
      %p245 = por %p243, %p244
      %p246 = scmp.ne.s32.totalorder %s237, %s238
      %p247 = scmp.eq.s32.totalorder %s35, 0
      %p248 = por %p246, %p247
      %p249 = scmp.ne.s32.totalorder %s237, %s238
      %p250 = scmp.eq.s32.totalorder %s36, 1
      %p251 = por %p249, %p250
      %p253 = scmp.ne.s32.totalorder %s238, %s252
      %p254 = scmp.eq.s32.totalorder %s36, 0
      %p255 = por %p253, %p254
      %s257 = sadd.s32 %s256, 1
      %p260 = scmp.eq.s32.totalorder %s30, 1
      %p261 = scmp.ne.s32.totalorder %s256, %s258
      %p262 = scmp.eq.s32.totalorder %s30, 0
      %p263 = por %p261, %p262
      %p264 = scmp.ne.s32.totalorder %s256, %s258
      %p265 = scmp.eq.s32.totalorder %s35, 1
      %p266 = por %p264, %p265
      %p267 = scmp.ne.s32.totalorder %s258, %s259
      %p268 = scmp.eq.s32.totalorder %s35, 0
      %p269 = por %p267, %p268
      %p270 = scmp.ne.s32.totalorder %s258, %s259
      %p271 = scmp.eq.s32.totalorder %s36, 1
      %p272 = por %p270, %p271
      %p274 = scmp.ne.s32.totalorder %s259, %s273
      %p275 = scmp.eq.s32.totalorder %s36, 0
      %p276 = por %p274, %p275
      %s278 = sadd.s32 %s277, 1
      %p281 = scmp.eq.s32.totalorder %s30, 1
      %p282 = scmp.ne.s32.totalorder %s277, %s279
      %p283 = scmp.eq.s32.totalorder %s30, 0
      %p284 = por %p282, %p283
      %p285 = scmp.ne.s32.totalorder %s277, %s279
      %p286 = scmp.eq.s32.totalorder %s35, 1
      %p287 = por %p285, %p286
      %p288 = scmp.ne.s32.totalorder %s279, %s280
      %p289 = scmp.eq.s32.totalorder %s35, 0
      %p290 = por %p288, %p289
      %p291 = scmp.ne.s32.totalorder %s279, %s280
      %p292 = scmp.eq.s32.totalorder %s36, 1
      %p293 = por %p291, %p292
      %p295 = scmp.ne.s32.totalorder %s280, %s294
      %p296 = scmp.eq.s32.totalorder %s36, 0
      %p297 = por %p295, %p296
      %s299 = sadd.s32 %s298, 1
      %p302 = scmp.eq.s32.totalorder %s30, 1
      %p303 = scmp.ne.s32.totalorder %s298, %s300
      %p304 = scmp.eq.s32.totalorder %s30, 0
      %p305 = por %p303, %p304
      %p306 = scmp.ne.s32.totalorder %s298, %s300
      %p307 = scmp.eq.s32.totalorder %s35, 1
      %p308 = por %p306, %p307
      %p309 = scmp.ne.s32.totalorder %s300, %s301
      %p310 = scmp.eq.s32.totalorder %s35, 0
      %p311 = por %p309, %p310
      %p312 = scmp.ne.s32.totalorder %s300, %s301
      %p313 = scmp.eq.s32.totalorder %s36, 1
      %p314 = por %p312, %p313
      %p316 = scmp.ne.s32.totalorder %s301, %s315
      %p317 = scmp.eq.s32.totalorder %s36, 0
      %p318 = por %p316, %p317
      %s320 = sadd.s32 %s319, 1
      %p323 = scmp.eq.s32.totalorder %s30, 1
      %p324 = scmp.ne.s32.totalorder %s319, %s321
      %p325 = scmp.eq.s32.totalorder %s30, 0
      %p326 = por %p324, %p325
      %p327 = scmp.ne.s32.totalorder %s319, %s321
      %p328 = scmp.eq.s32.totalorder %s35, 1
      %p329 = por %p327, %p328
      %p330 = scmp.ne.s32.totalorder %s321, %s322
      %p331 = scmp.eq.s32.totalorder %s35, 0
      %p332 = por %p330, %p331
      %p333 = scmp.ne.s32.totalorder %s321, %s322
      %p334 = scmp.eq.s32.totalorder %s36, 1
      %p335 = por %p333, %p334
      %p337 = scmp.ne.s32.totalorder %s322, %s336
      %p338 = scmp.eq.s32.totalorder %s36, 0
      %p339 = por %p337, %p338
      %s341 = sadd.s32 %s340, 1
      %p344 = scmp.eq.s32.totalorder %s30, 1
      %p345 = scmp.ne.s32.totalorder %s340, %s342
      %p346 = scmp.eq.s32.totalorder %s30, 0
      %p347 = por %p345, %p346
      %p348 = scmp.ne.s32.totalorder %s340, %s342
      %p349 = scmp.eq.s32.totalorder %s35, 1
      %p350 = por %p348, %p349
      %p351 = scmp.ne.s32.totalorder %s342, %s343
      %p352 = scmp.eq.s32.totalorder %s35, 0
      %p353 = por %p351, %p352
      %p354 = scmp.ne.s32.totalorder %s342, %s343
      %p355 = scmp.eq.s32.totalorder %s36, 1
      %p356 = por %p354, %p355
      %p358 = scmp.ne.s32.totalorder %s343, %s357
      %p359 = scmp.eq.s32.totalorder %s36, 0
      %p360 = por %p358, %p359
      %s362 = sadd.s32 %s361, 1
      %p365 = scmp.eq.s32.totalorder %s30, 1
      %p366 = scmp.ne.s32.totalorder %s361, %s363
      %p367 = scmp.eq.s32.totalorder %s30, 0
      %p368 = por %p366, %p367
      %p369 = scmp.ne.s32.totalorder %s361, %s363
      %p370 = scmp.eq.s32.totalorder %s35, 1
      %p371 = por %p369, %p370
      %p372 = scmp.ne.s32.totalorder %s363, %s364
      %p373 = scmp.eq.s32.totalorder %s35, 0
      %p374 = por %p372, %p373
      %p375 = scmp.ne.s32.totalorder %s363, %s364
      %p376 = scmp.eq.s32.totalorder %s36, 1
      %p377 = por %p375, %p376
      %p379 = scmp.ne.s32.totalorder %s364, %s378
      %p380 = scmp.eq.s32.totalorder %s36, 0
      %p381 = por %p379, %p380
      %s383 = sadd.s32 %s382, 1
      %p386 = scmp.eq.s32.totalorder %s30, 1
      %p387 = scmp.ne.s32.totalorder %s382, %s384
      %p388 = scmp.eq.s32.totalorder %s30, 0
      %p389 = por %p387, %p388
      %p390 = scmp.ne.s32.totalorder %s382, %s384
      %p391 = scmp.eq.s32.totalorder %s35, 1
      %p392 = por %p390, %p391
      %p393 = scmp.ne.s32.totalorder %s384, %s385
      %p394 = scmp.eq.s32.totalorder %s35, 0
      %p395 = por %p393, %p394
      %p396 = scmp.ne.s32.totalorder %s384, %s385
      %p397 = scmp.eq.s32.totalorder %s36, 1
      %p398 = por %p396, %p397
      %p400 = scmp.ne.s32.totalorder %s385, %s399
      %p401 = scmp.eq.s32.totalorder %s36, 0
      %p402 = por %p400, %p401
      %s404 = sadd.s32 %s403, 1
      %p407 = scmp.eq.s32.totalorder %s30, 1
      %p408 = scmp.ne.s32.totalorder %s403, %s405
      %p409 = scmp.eq.s32.totalorder %s30, 0
      %p410 = por %p408, %p409
      %p411 = scmp.ne.s32.totalorder %s403, %s405
      %p412 = scmp.eq.s32.totalorder %s35, 1
      %p413 = por %p411, %p412
      %p414 = scmp.ne.s32.totalorder %s405, %s406
      %p415 = scmp.eq.s32.totalorder %s35, 0
      %p416 = por %p414, %p415
      %p417 = scmp.ne.s32.totalorder %s405, %s406
      %p418 = scmp.eq.s32.totalorder %s36, 1
      %p419 = por %p417, %p418
      %p421 = scmp.ne.s32.totalorder %s406, %s420
      %p422 = scmp.eq.s32.totalorder %s36, 0
      %p423 = por %p421, %p422
      %s424 = ssub.s32 %s37, %s49
      %s425 = ssub.s32 %s38, %s45
      %s426 = sor.u32 %s424, %s425
      %p427 = scmp.eq.s32.totalorder %s426, 0
      %s429 = sadd.s32 %s428, 1
      %s430 = scalar_select %p427, %s428, %s429
      %p433 = pneg %p427
      %p434 = scmp.eq.s32.totalorder %s30, 1
      %p435 = por %p433, %p434
      %p436 = scmp.ne.s32.totalorder %s428, %s431
      %p437 = scmp.eq.s32.totalorder %s30, 0
      %p438 = por %p436, %p437
      %p439 = scmp.ne.s32.totalorder %s428, %s431
      %p440 = scmp.eq.s32.totalorder %s35, 1
      %p441 = por %p439, %p440
      %p442 = scmp.ne.s32.totalorder %s431, %s432
      %p443 = scmp.eq.s32.totalorder %s35, 0
      %p444 = por %p442, %p443
      %p445 = scmp.ne.s32.totalorder %s431, %s432
      %p446 = scmp.eq.s32.totalorder %s36, 1
      %p447 = por %p445, %p446
      %p449 = scmp.ne.s32.totalorder %s432, %s448
      %p450 = scmp.eq.s32.totalorder %s36, 0
      %p451 = por %p449, %p450
      %p452 = scmp.le.s32.totalorder 1, %s30
      %p453 = scmp.lt.s32.totalorder %s30, 3
      %p454 = pnand %p452, %p453
      %p455 = pneg %p454
      // Predicated region
      $region9: #{tpu_custom_call.1} parent=5 // pred_check
        _
      $region10: #{tpu_custom_call.1} parent=5 // pred_check_branch
        %457 = sbr.rel (%p454) target = $region12
      $region11: #{tpu_custom_call.1} parent=5 // pred_region
        %s458 = ssub.s32 %s30, 1
        // Predicated region
        $region13: #{tpu_custom_call.1} parent=11 // pred_check
          %p459 = pneg %p143
        $region14: #{tpu_custom_call.1} parent=11 // pred_check_branch
          %461 = sbr.rel (%p459) target = $region16
        $region15: #{tpu_custom_call.1} parent=11 // pred_region
          _
        $region16: #{tpu_custom_call.1} parent=11 // pred_fallthru
          _
        // Predicated region
        $region17: #{tpu_custom_call.1} parent=11 // pred_check
          %p462 = pneg %p164
        $region18: #{tpu_custom_call.1} parent=11 // pred_check_branch
          %464 = sbr.rel (%p462) target = $region20
        $region19: #{tpu_custom_call.1} parent=11 // pred_region
          %s466 = ssub.s32 16, 16
          %467 = vsyncadd [#allocation5], %s466
          %s469 = sshll.u32 [#allocation4], 4
          %s470 = int_to_ptr.vmem [resolvable:$true] %s469
          %472 = dma.hbm_to_vmem [thread:$0]  %s4, 16, %s470, [#allocation5]
        $region20: #{tpu_custom_call.1} parent=11 // pred_fallthru
          _
        // Predicated region
        $region21: #{tpu_custom_call.1} parent=11 // pred_check
          %p473 = pneg %p185
        $region22: #{tpu_custom_call.1} parent=11 // pred_check_branch
          %475 = sbr.rel (%p473) target = $region24
        $region23: #{tpu_custom_call.1} parent=11 // pred_region
          %s477 = ssub.s32 256, 256
          %478 = vsyncadd [#allocation8], %s477
          %s479 = sshll.u32 [#allocation7], 4
          %s480 = int_to_ptr.vmem [resolvable:$true] %s479
          %485 = dma.hbm_to_vmem [thread:$0]  %s5, 256, %s480, [#allocation8], 64, 64, 4
        $region24: #{tpu_custom_call.1} parent=11 // pred_fallthru
          _
        // Predicated region
        $region25: #{tpu_custom_call.1} parent=11 // pred_check
          %p486 = pneg %p206
        $region26: #{tpu_custom_call.1} parent=11 // pred_check_branch
          %488 = sbr.rel (%p486) target = $region28
        $region27: #{tpu_custom_call.1} parent=11 // pred_region
          %s490 = ssub.s32 16, 16
          %491 = vsyncadd [#allocation8], %s490
          %s493 = sshll.u32 [#allocation9], 4
          %s494 = int_to_ptr.vmem [resolvable:$true] %s493
          %496 = dma.hbm_to_vmem [thread:$0]  %s6, 16, %s494, [#allocation8]
        $region28: #{tpu_custom_call.1} parent=11 // pred_fallthru
          _
        // Predicated region
        $region29: #{tpu_custom_call.1} parent=11 // pred_check
          %p497 = pneg %p227
        $region30: #{tpu_custom_call.1} parent=11 // pred_check_branch
          %499 = sbr.rel (%p497) target = $region32
        $region31: #{tpu_custom_call.1} parent=11 // pred_region
          %s501 = ssub.s32 256, 256
          %502 = vsyncadd [#allocation11], %s501
          %s503 = sshll.u32 [#allocation10], 4
          %s504 = int_to_ptr.vmem [resolvable:$true] %s503
          %509 = dma.hbm_to_vmem [thread:$0]  %s7, 256, %s504, [#allocation11], 64, 64, 4
        $region32: #{tpu_custom_call.1} parent=11 // pred_fallthru
          _
        // Predicated region
        $region33: #{tpu_custom_call.1} parent=11 // pred_check
          %p510 = pneg %p248
        $region34: #{tpu_custom_call.1} parent=11 // pred_check_branch
          %512 = sbr.rel (%p510) target = $region36
        $region35: #{tpu_custom_call.1} parent=11 // pred_region
          %s514 = ssub.s32 16, 16
          %515 = vsyncadd [#allocation11], %s514
          %s517 = sshll.u32 [#allocation12], 4
          %s518 = int_to_ptr.vmem [resolvable:$true] %s517
          %520 = dma.hbm_to_vmem [thread:$0]  %s8, 16, %s518, [#allocation11]
        $region36: #{tpu_custom_call.1} parent=11 // pred_fallthru
          _
        // Predicated region
        $region37: #{tpu_custom_call.1} parent=11 // pred_check
          %p521 = pneg %p269
        $region38: #{tpu_custom_call.1} parent=11 // pred_check_branch
          %523 = sbr.rel (%p521) target = $region40
        $region39: #{tpu_custom_call.1} parent=11 // pred_region
          %s525 = ssub.s32 16, 16
          %526 = vsyncadd [#allocation14], %s525
          %s528 = sshll.u32 [#allocation13], 4
          %s529 = int_to_ptr.vmem [resolvable:$true] %s528
          %531 = dma.hbm_to_vmem [thread:$0]  %s9, 16, %s529, [#allocation14]
        $region40: #{tpu_custom_call.1} parent=11 // pred_fallthru
          _
        // Predicated region
        $region41: #{tpu_custom_call.1} parent=11 // pred_check
          %p532 = pneg %p290
        $region42: #{tpu_custom_call.1} parent=11 // pred_check_branch
          %534 = sbr.rel (%p532) target = $region44
        $region43: #{tpu_custom_call.1} parent=11 // pred_region
          _
        $region44: #{tpu_custom_call.1} parent=11 // pred_fallthru
          _
        // Predicated region
        $region45: #{tpu_custom_call.1} parent=11 // pred_check
          %p535 = pneg %p311
        $region46: #{tpu_custom_call.1} parent=11 // pred_check_branch
          %537 = sbr.rel (%p535) target = $region48
        $region47: #{tpu_custom_call.1} parent=11 // pred_region
          _
        $region48: #{tpu_custom_call.1} parent=11 // pred_fallthru
          _
        // Predicated region
        $region49: #{tpu_custom_call.1} parent=11 // pred_check
          %p538 = pneg %p332
        $region50: #{tpu_custom_call.1} parent=11 // pred_check_branch
          %540 = sbr.rel (%p538) target = $region52
        $region51: #{tpu_custom_call.1} parent=11 // pred_region
          _
        $region52: #{tpu_custom_call.1} parent=11 // pred_fallthru
          _
        // Predicated region
        $region53: #{tpu_custom_call.1} parent=11 // pred_check
          %p541 = pneg %p353
        $region54: #{tpu_custom_call.1} parent=11 // pred_check_branch
          %543 = sbr.rel (%p541) target = $region56
        $region55: #{tpu_custom_call.1} parent=11 // pred_region
          _
        $region56: #{tpu_custom_call.1} parent=11 // pred_fallthru
          _
        // Predicated region
        $region57: #{tpu_custom_call.1} parent=11 // pred_check
          %p544 = pneg %p374
        $region58: #{tpu_custom_call.1} parent=11 // pred_check_branch
          %546 = sbr.rel (%p544) target = $region60
        $region59: #{tpu_custom_call.1} parent=11 // pred_region
          _
        $region60: #{tpu_custom_call.1} parent=11 // pred_fallthru
          _
        // Predicated region
        $region61: #{tpu_custom_call.1} parent=11 // pred_check
          %p547 = pneg %p395
        $region62: #{tpu_custom_call.1} parent=11 // pred_check_branch
          %549 = sbr.rel (%p547) target = $region64
        $region63: #{tpu_custom_call.1} parent=11 // pred_region
          _
        $region64: #{tpu_custom_call.1} parent=11 // pred_fallthru
          _
        // Predicated region
        $region65: #{tpu_custom_call.1} parent=11 // pred_check
          %p550 = pneg %p416
        $region66: #{tpu_custom_call.1} parent=11 // pred_check_branch
          %552 = sbr.rel (%p550) target = $region68
        $region67: #{tpu_custom_call.1} parent=11 // pred_region
          _
        $region68: #{tpu_custom_call.1} parent=11 // pred_fallthru
          _
      $region12: #{tpu_custom_call.1} parent=5 // pred_fallthru
        _
      %p553 = scmp.lt.s32.totalorder %s30, 2
      // Predicated region
      $region69: #{tpu_custom_call.1} parent=5 // pred_check
        %p554 = pneg %p553
      $region70: #{tpu_custom_call.1} parent=5 // pred_check_branch
        %556 = sbr.rel (%p554) target = $region72
      $region71: #{tpu_custom_call.1} parent=5 // pred_region
        // Predicated region
        $region73: #{tpu_custom_call.1} parent=71 // pred_check
          %p557 = pneg %p62
        $region74: #{tpu_custom_call.1} parent=71 // pred_check_branch
          %559 = sbr.rel (%p557) target = $region76
        $region75: #{tpu_custom_call.1} parent=71 // pred_region
          %p560 = scmp.lt.s32.totalorder %s37, 1
          %s561 = scalar_select %p560, %s37, 1
          %s562 = smul.addr %s561, 8
          %s563 = scalar_lea.vmem %s0, %s562
        $region76: #{tpu_custom_call.1} parent=71 // pred_fallthru
          _
        // Predicated region
        $region77: #{tpu_custom_call.1} parent=71 // pred_check
          %p564 = pneg %p90
        $region78: #{tpu_custom_call.1} parent=71 // pred_check_branch
          %566 = sbr.rel (%p564) target = $region80
        $region79: #{tpu_custom_call.1} parent=71 // pred_region
          %p567 = scmp.lt.s32.totalorder %s37, 1
          %s568 = scalar_select %p567, %s37, 1
          %p569 = scmp.lt.s32.totalorder %s38, 0
          %s570 = scalar_select %p569, %s38, 0
          %s571 = sadd.s32 %s570, %s568
          %s572 = smul.addr %s571, 8
          %s573 = scalar_lea.vmem %s1, %s572
        $region80: #{tpu_custom_call.1} parent=71 // pred_fallthru
          _
        // Predicated region
        $region81: #{tpu_custom_call.1} parent=71 // pred_check
          %p574 = pneg %p116
        $region82: #{tpu_custom_call.1} parent=71 // pred_check_branch
          %576 = sbr.rel (%p574) target = $region84
        $region83: #{tpu_custom_call.1} parent=71 // pred_region
          %p577 = scmp.lt.s32.totalorder %s37, 1
          %s578 = scalar_select %p577, %s37, 1
          %s579 = scalar_lea.vmem %s2, %s578
        $region84: #{tpu_custom_call.1} parent=71 // pred_fallthru
          _
      $region72: #{tpu_custom_call.1} parent=5 // pred_fallthru
        _
      %p580 = scmp.le.s32.totalorder 1, %s30
      %p581 = scmp.lt.s32.totalorder %s30, 3
      %p582 = pnand %p580, %p581
      %p583 = pneg %p582
      // Predicated region
      $region85: #{tpu_custom_call.1} parent=5 // pred_check
        _
      $region86: #{tpu_custom_call.1} parent=5 // pred_check_branch
        %585 = sbr.rel (%p582) target = $region88
      $region87: #{tpu_custom_call.1} parent=5 // pred_region
        %s586 = ssub.s32 %s30, 1
        // Predicated region
        $region89: #{tpu_custom_call.1} parent=87 // pred_check
          %p587 = pneg %p164
        $region90: #{tpu_custom_call.1} parent=87 // pred_check_branch
          %589 = sbr.rel (%p587) target = $region92
        $region91: #{tpu_custom_call.1} parent=87 // pred_region
          %590 = dma.done [#allocation5], 16
        $region92: #{tpu_custom_call.1} parent=87 // pred_fallthru
          _
        // Predicated region
        $region93: #{tpu_custom_call.1} parent=87 // pred_check
          %p591 = pneg %p185
        $region94: #{tpu_custom_call.1} parent=87 // pred_check_branch
          %593 = sbr.rel (%p591) target = $region96
        $region95: #{tpu_custom_call.1} parent=87 // pred_region
          %594 = dma.done [#allocation8], 256
        $region96: #{tpu_custom_call.1} parent=87 // pred_fallthru
          _
        // Predicated region
        $region97: #{tpu_custom_call.1} parent=87 // pred_check
          %p595 = pneg %p206
        $region98: #{tpu_custom_call.1} parent=87 // pred_check_branch
          %597 = sbr.rel (%p595) target = $region100
        $region99: #{tpu_custom_call.1} parent=87 // pred_region
          %598 = dma.done [#allocation8], 16
        $region100: #{tpu_custom_call.1} parent=87 // pred_fallthru
          _
        // Predicated region
        $region101: #{tpu_custom_call.1} parent=87 // pred_check
          %p599 = pneg %p227
        $region102: #{tpu_custom_call.1} parent=87 // pred_check_branch
          %601 = sbr.rel (%p599) target = $region104
        $region103: #{tpu_custom_call.1} parent=87 // pred_region
          %602 = dma.done [#allocation11], 256
        $region104: #{tpu_custom_call.1} parent=87 // pred_fallthru
          _
        // Predicated region
        $region105: #{tpu_custom_call.1} parent=87 // pred_check
          %p603 = pneg %p248
        $region106: #{tpu_custom_call.1} parent=87 // pred_check_branch
          %605 = sbr.rel (%p603) target = $region108
        $region107: #{tpu_custom_call.1} parent=87 // pred_region
          %606 = dma.done [#allocation11], 16
        $region108: #{tpu_custom_call.1} parent=87 // pred_fallthru
          _
        // Predicated region
        $region109: #{tpu_custom_call.1} parent=87 // pred_check
          %p607 = pneg %p269
        $region110: #{tpu_custom_call.1} parent=87 // pred_check_branch
          %609 = sbr.rel (%p607) target = $region112
        $region111: #{tpu_custom_call.1} parent=87 // pred_region
          %610 = dma.done [#allocation14], 16
        $region112: #{tpu_custom_call.1} parent=87 // pred_fallthru
          _
        %p611 = scmp.lt.s32.totalorder %s39, 1
        %s612 = scalar_select %p611, %s39, 1
        %s613 = smul.addr %s612, 8
        %s614 = scalar_lea.vmem %s0, %s613
        %p615 = pneg %p68
        %p616 = pneg %p65
        %p617 = scmp.lt.s32.totalorder %s39, 1
        %s618 = scalar_select %p617, %s39, 1
        %p619 = scmp.lt.s32.totalorder %s40, 0
        %s620 = scalar_select %p619, %s40, 0
        %s621 = sadd.s32 %s620, %s618
        %s622 = smul.addr %s621, 8
        %s623 = scalar_lea.vmem %s1, %s622
        %p624 = pneg %p96
        %p625 = pneg %p93
        %p626 = scmp.lt.s32.totalorder %s39, 1
        %s627 = scalar_select %p626, %s39, 1
        %s628 = scalar_lea.vmem %s2, %s627
        %p629 = pneg %p122
        %p630 = pneg %p119
        %p631 = pneg %p143
        %p632 = pneg %p140
        %p633 = pneg %p164
        %p634 = pneg %p161
        %p635 = pneg %p185
        %p636 = pneg %p182
        %p637 = pneg %p206
        %p638 = pneg %p203
        %p639 = pneg %p227
        %p640 = pneg %p224
        %p641 = pneg %p248
        %p642 = pneg %p245
        %p643 = pneg %p269
        %p644 = pneg %p266
        %p645 = pneg %p290
        %p646 = pneg %p287
        %p647 = pneg %p311
        %p648 = pneg %p308
        %p649 = pneg %p332
        %p650 = pneg %p329
        %p651 = pneg %p353
        %p652 = pneg %p350
        %p653 = pneg %p374
        %p654 = pneg %p371
        %p655 = pneg %p395
        %p656 = pneg %p392
        %p657 = pneg %p416
        %p658 = pneg %p413
        %p659 = pneg %p444
        %p660 = pneg %p441
        %s661 = sand.u32 %s431, 1
        %s662 = scalar_lea.sflag [#allocation6], %s661
        %s663 = sand.u32 %s431, 1
        %s664 = smul.addr %s663, 8
        %s665 = scalar_lea.vmem [#allocation15], %s664
        %p666 = scmp.lt.s32.totalorder %s39, 1
        %s667 = scalar_select %p666, %s39, 1
        %s668 = smul.addr %s667, 8
        %s669 = scalar_lea.vmem %s0, %s668
        %p670 = scmp.lt.s32.totalorder %s39, 1
        %s671 = scalar_select %p670, %s39, 1
        %p672 = scmp.lt.s32.totalorder %s40, 0
        %s673 = scalar_select %p672, %s40, 0
        %s674 = sadd.s32 %s673, %s671
        %s675 = smul.addr %s674, 8
        %s676 = scalar_lea.vmem %s1, %s675
        %p677 = scmp.lt.s32.totalorder %s39, 1
        %s678 = scalar_select %p677, %s39, 1
        %s679 = scalar_lea.vmem %s2, %s678
        %p681 = scmp.eq.s32.totalorder %s40, 0
        // Predicated region
        $region113: #{tpu_custom_call.1} parent=87 // pred_check
          %p682 = pneg %p681
        $region114: #{tpu_custom_call.1} parent=87 // pred_check_branch
          %684 = sbr.rel (%p682) target = $region116
        $region115: #{tpu_custom_call.1} parent=87 // pred_region
          %v685 = vld [vmem:[%s669] sm:$0xff]
          %v686 = vpack.c.bf16 %v685, %v685
          %v687 = vld [vmem:[#allocation7] sm:$0xf]
          %v688 = vld [vmem:[#allocation7 + $0x4] sm:$0xf]
          %v689 = vld [vmem:[#allocation7 + $0x8] sm:$0xf]
          %v690 = vld [vmem:[#allocation7 + $0xc] sm:$0xf]
          %v691 = vld [vmem:[#allocation9] sm:$0x1]
          %v693 = vlaneseq
          %v694 = vshrl.u32 %v693, 7
          %v695 = vsub.s32 0, %v694
          %v696 = vrot.slane %v691, %v695
          %v702 = vunpack.c.l.b16 %v687
          %v703 = vunpack.c.l.b16 %v688
          %v704 = vunpack.c.l.b16 %v689
          %v705 = vunpack.c.l.b16 %v690
          %v706 = vpack.c.b16 %v703, %v702
          %v707 = vpack.c.b16 %v705, %v704
          %vm710 = vcmask 261120
          %v712 = vsel %vm710, %v686, 0
          %714 = vmatprep.subr.bf16.mxu0 0
          %715 = vmatpush1.bf16.msra.mxu0 %v706
          %716 = vmatprep.subr.bf16.mxu0 0
          %717 = vmatpush1.bf16.msra.mxu0 %v707
          %718 = vmatprep.subr.bf16.mxu0 0
          %719 = vmatpush1.bf16.msra.mxu0 0
          %720 = vmatprep.subr.bf16.mxu0 0
          %721 = vmatpush1.bf16.msra.mxu0 0
          %722 = vmatprep.subr.bf16.mxu0 0
          %723 = vmatpush1.bf16.msra.mxu0 0
          %724 = vmatprep.subr.bf16.mxu0 0
          %725 = vmatpush1.bf16.msra.mxu0 0
          %726 = vmatprep.subr.bf16.mxu0 0
          %727 = vmatpush1.bf16.msra.mxu0 0
          %728 = vmatprep.subr.bf16.mxu0 0
          %729 = vmatpush1.bf16.msra.mxu0 0
          %730 = vmatprep.subr.bf16.mxu0 0
          %731 = vmatpush1.bf16.msra.mxu0 0
          %732 = vmatprep.subr.bf16.mxu0 0
          %733 = vmatpush1.bf16.msra.mxu0 0
          %734 = vmatprep.subr.bf16.mxu0 0
          %735 = vmatpush1.bf16.msra.mxu0 0
          %736 = vmatprep.subr.bf16.mxu0 0
          %737 = vmatpush1.bf16.msra.mxu0 0
          %738 = vmatprep.subr.bf16.mxu0 0
          %739 = vmatpush1.bf16.msra.mxu0 0
          %740 = vmatprep.subr.bf16.mxu0 0
          %741 = vmatpush1.bf16.msra.mxu0 0
          %742 = vmatprep.subr.bf16.mxu0 0
          %743 = vmatpush1.bf16.msra.mxu0 0
          %744 = vmatprep.subr.bf16.mxu0 0
          %745 = vmatpush1.bf16.msra.mxu0 0
          %746 = vmatprep.mubr.bf16.mxu0 0
          %747 = vmatmul.mubr.bf16.gmra.mrb[0].mxu0 %v712
          %v748 = vpop.f32.mrb[0].mxu0
          %v749 = vadd.f32 %v696, %v748
          %v750 = vpop.f32.mrb[0].mxu0
          %v751 = vpop.f32.mrb[0].mxu0
          %v752 = vpop.f32.mrb[0].mxu0
          %753 = vdwg.mxu0
          %v754 = vpack.c.bf16 %v749, %v749
          %vm755 = vcmask 519168
          %756 = vst.msk [vmem:[#allocation2] sm:$0xf] %vm755, %v754
        $region116: #{tpu_custom_call.1} parent=87 // pred_fallthru
          _
        %v757 = vld [vmem:[%s676] sm:$0xff]
        %v758 = vld [vmem:[%s679] sm:$0x1]
        %v759 = vpack.c.bf16 %v757, %v757
        %v760 = vld [vmem:[%s3] sm:$0xf]
        %v761 = vld [vmem:[%s3 + $0x4] sm:$0xf]
        %v762 = vld [vmem:[%s3 + $0x8] sm:$0xf]
        %v763 = vld [vmem:[%s3 + $0xc] sm:$0xf]
        %v764 = vld [vmem:[#allocation4] sm:$0x1]
        %v766 = vlaneseq
        %v767 = vshrl.u32 %v766, 7
        %v768 = vsub.s32 0, %v767
        %v769 = vrot.slane %v764, %v768
        %v775 = vunpack.c.l.b16 %v760
        %v776 = vunpack.c.l.b16 %v761
        %v777 = vunpack.c.l.b16 %v762
        %v778 = vunpack.c.l.b16 %v763
        %v779 = vpack.c.b16 %v776, %v775
        %v780 = vpack.c.b16 %v778, %v777
        %vm783 = vcmask 261120
        %v785 = vsel %vm783, %v759, 0
        %787 = vmatprep.subr.bf16.mxu0 0
        %788 = vmatpush1.bf16.msra.mxu0 %v779
        %789 = vmatprep.subr.bf16.mxu0 0
        %790 = vmatpush1.bf16.msra.mxu0 %v780
        %791 = vmatprep.subr.bf16.mxu0 0
        %792 = vmatpush1.bf16.msra.mxu0 0
        %793 = vmatprep.subr.bf16.mxu0 0
        %794 = vmatpush1.bf16.msra.mxu0 0
        %795 = vmatprep.subr.bf16.mxu0 0
        %796 = vmatpush1.bf16.msra.mxu0 0
        %797 = vmatprep.subr.bf16.mxu0 0
        %798 = vmatpush1.bf16.msra.mxu0 0
        %799 = vmatprep.subr.bf16.mxu0 0
        %800 = vmatpush1.bf16.msra.mxu0 0
        %801 = vmatprep.subr.bf16.mxu0 0
        %802 = vmatpush1.bf16.msra.mxu0 0
        %803 = vmatprep.subr.bf16.mxu0 0
        %804 = vmatpush1.bf16.msra.mxu0 0
        %805 = vmatprep.subr.bf16.mxu0 0
        %806 = vmatpush1.bf16.msra.mxu0 0
        %807 = vmatprep.subr.bf16.mxu0 0
        %808 = vmatpush1.bf16.msra.mxu0 0
        %809 = vmatprep.subr.bf16.mxu0 0
        %810 = vmatpush1.bf16.msra.mxu0 0
        %811 = vmatprep.subr.bf16.mxu0 0
        %812 = vmatpush1.bf16.msra.mxu0 0
        %813 = vmatprep.subr.bf16.mxu0 0
        %814 = vmatpush1.bf16.msra.mxu0 0
        %815 = vmatprep.subr.bf16.mxu0 0
        %816 = vmatpush1.bf16.msra.mxu0 0
        %817 = vmatprep.subr.bf16.mxu0 0
        %818 = vmatpush1.bf16.msra.mxu0 0
        %819 = vmatprep.mubr.bf16.mxu0 0
        %820 = vmatmul.mubr.bf16.gmra.mrb[0].mxu0 %v785
        %v821 = vpop.f32.mrb[0].mxu0
        %v822 = vadd.f32 %v769, %v821
        %v823 = vpop.f32.mrb[0].mxu0
        %v824 = vpop.f32.mrb[0].mxu0
        %v825 = vpop.f32.mrb[0].mxu0
        %826 = vdwg.mxu0
        %v827 = vpack.c.bf16 %v822, %v822
        %v828 = vld [vmem:[#allocation2] sm:$0xf]
        %v830 = vlaneseq
        %v831 = vshrl.u32 %v830, 7
        %v832 = vsub.s32 0, %v831
        %v833 = vrot.slane %v758, %v832
        %vm835 = vcmask 130048
        %v837 = vsel %vm835, %v827, 0
        %v840 = vsel %vm835, %v828, 0
        %842 = vmatprep.subr.bf16.mxu0 0
        %843 = vmatpush1.bf16.xpose.msra.mxu0 %v840
        %844 = vmatprep.subr.bf16.mxu0 0
        %845 = vmatpush1.bf16.xpose.msra.mxu0 0
        %846 = vmatprep.subr.bf16.mxu0 0
        %847 = vmatpush1.bf16.xpose.msra.mxu0 0
        %848 = vmatprep.subr.bf16.mxu0 0
        %849 = vmatpush1.bf16.xpose.msra.mxu0 0
        %850 = vmatprep.subr.bf16.mxu0 0
        %851 = vmatpush1.bf16.xpose.msra.mxu0 0
        %852 = vmatprep.subr.bf16.mxu0 0
        %853 = vmatpush1.bf16.xpose.msra.mxu0 0
        %854 = vmatprep.subr.bf16.mxu0 0
        %855 = vmatpush1.bf16.xpose.msra.mxu0 0
        %856 = vmatprep.subr.bf16.mxu0 0
        %857 = vmatpush1.bf16.xpose.msra.mxu0 0
        %858 = vmatprep.subr.bf16.mxu0 0
        %859 = vmatpush1.bf16.xpose.msra.mxu0 0
        %860 = vmatprep.subr.bf16.mxu0 0
        %861 = vmatpush1.bf16.xpose.msra.mxu0 0
        %862 = vmatprep.subr.bf16.mxu0 0
        %863 = vmatpush1.bf16.xpose.msra.mxu0 0
        %864 = vmatprep.subr.bf16.mxu0 0
        %865 = vmatpush1.bf16.xpose.msra.mxu0 0
        %866 = vmatprep.subr.bf16.mxu0 0
        %867 = vmatpush1.bf16.xpose.msra.mxu0 0
        %868 = vmatprep.subr.bf16.mxu0 0
        %869 = vmatpush1.bf16.xpose.msra.mxu0 0
        %870 = vmatprep.subr.bf16.mxu0 0
        %871 = vmatpush1.bf16.xpose.msra.mxu0 0
        %872 = vmatprep.subr.bf16.mxu0 0
        %873 = vmatpush1.bf16.xpose.msra.mxu0 0
        %874 = vmatprep.mubr.bf16.mxu0 0
        %875 = vmatmul.mubr.bf16.gmra.mrb[0].mxu0 %v837
        %v876 = vpop.f32.mrb[0].mxu0
        %v877 = vadd.f32 %v833, %v876
        %v878 = vpop.f32.mrb[0].mxu0
        %v879 = vpop.f32.mrb[0].mxu0
        %v880 = vpop.f32.mrb[0].mxu0
        %881 = vdwg.mxu0
        %vm882 = vcmask 64512
        %v883 = vsel %vm882, %v877, -inf
        %884 = vmax.xlane.f32.xlu0 %v883
        %v885 = vpop.xlane.xlu0 %884
        %v886 = vsub.f32 %v877, %v885
        %v887 = vmul.f32 %v886, 1.442695
        %v888 = vpow.pop %v887
        %v889 = vsel %vm882, %v888, 0.0
        %890 = vadd.xlane.f32.xlu0 %v889
        %v891 = vpop.xlane.xlu0 %890
        %v892 = vrcp.pop %v891
        %v893 = vmul.f32 %v888, %v892
        %v894 = vpack.c.bf16 %v893, %v893
        %v896 = vunpack.c.l.b16 %v828
        %v897 = vpack.c.b16 %v896, %v896
        %898 = vrot.lane.b32.xlu0 %v897, 96
        %v899 = vpop.permute.xlu0 %898
        %v901 = vsel %vm882, %v894, 0
        %vm903 = vcmask 1043456
        %v905 = vsel %vm903, %v899, 0
        %907 = vmatprep.subr.bf16.mxu0 0
        %908 = vmatpush1.bf16.msra.mxu0 %v905
        %909 = vmatprep.subr.bf16.mxu0 0
        %910 = vmatpush1.bf16.msra.mxu0 0
        %911 = vmatprep.subr.bf16.mxu0 0
        %912 = vmatpush1.bf16.msra.mxu0 0
        %913 = vmatprep.subr.bf16.mxu0 0
        %914 = vmatpush1.bf16.msra.mxu0 0
        %915 = vmatprep.subr.bf16.mxu0 0
        %916 = vmatpush1.bf16.msra.mxu0 0
        %917 = vmatprep.subr.bf16.mxu0 0
        %918 = vmatpush1.bf16.msra.mxu0 0
        %919 = vmatprep.subr.bf16.mxu0 0
        %920 = vmatpush1.bf16.msra.mxu0 0
        %921 = vmatprep.subr.bf16.mxu0 0
        %922 = vmatpush1.bf16.msra.mxu0 0
        %923 = vmatprep.subr.bf16.mxu0 0
        %924 = vmatpush1.bf16.msra.mxu0 0
        %925 = vmatprep.subr.bf16.mxu0 0
        %926 = vmatpush1.bf16.msra.mxu0 0
        %927 = vmatprep.subr.bf16.mxu0 0
        %928 = vmatpush1.bf16.msra.mxu0 0
        %929 = vmatprep.subr.bf16.mxu0 0
        %930 = vmatpush1.bf16.msra.mxu0 0
        %931 = vmatprep.subr.bf16.mxu0 0
        %932 = vmatpush1.bf16.msra.mxu0 0
        %933 = vmatprep.subr.bf16.mxu0 0
        %934 = vmatpush1.bf16.msra.mxu0 0
        %935 = vmatprep.subr.bf16.mxu0 0
        %936 = vmatpush1.bf16.msra.mxu0 0
        %937 = vmatprep.subr.bf16.mxu0 0
        %938 = vmatpush1.bf16.msra.mxu0 0
        %939 = vmatprep.mubr.bf16.mxu0 0
        %940 = vmatmul.mubr.bf16.gmra.mrb[0].mxu0 %v901
        %v941 = vpop.f32.mrb[0].mxu0
        %v942 = vadd.f32 0.0, %v941
        %v943 = vpop.f32.mrb[0].mxu0
        %v944 = vpop.f32.mrb[0].mxu0
        %v945 = vpop.f32.mrb[0].mxu0
        %946 = vdwg.mxu0
        %947 = vst.msk [vmem:[#allocation3] sm:$0xff] %vm835, %v942
        %v948 = vld [vmem:[#allocation2] sm:$0xf]
        %950 = vrot.lane.b32.xlu0 %v827, 112
        %v951 = vpop.permute.xlu0 %950
        %v953 = vunpack.c.l.b16 %v948
        %v954 = vpack.c.b16 %v953, %v953
        %955 = vrot.lane.b32.xlu0 %v954, 112
        %v956 = vpop.permute.xlu0 %955
        %v958 = vsel %vm835, %v951, 0
        %v961 = vsel %vm835, %v956, 0
        %963 = vmatprep.subr.bf16.mxu0 0
        %964 = vmatpush1.bf16.xpose.msra.mxu0 %v961
        %965 = vmatprep.subr.bf16.mxu0 0
        %966 = vmatpush1.bf16.xpose.msra.mxu0 0
        %967 = vmatprep.subr.bf16.mxu0 0
        %968 = vmatpush1.bf16.xpose.msra.mxu0 0
        %969 = vmatprep.subr.bf16.mxu0 0
        %970 = vmatpush1.bf16.xpose.msra.mxu0 0
        %971 = vmatprep.subr.bf16.mxu0 0
        %972 = vmatpush1.bf16.xpose.msra.mxu0 0
        %973 = vmatprep.subr.bf16.mxu0 0
        %974 = vmatpush1.bf16.xpose.msra.mxu0 0
        %975 = vmatprep.subr.bf16.mxu0 0
        %976 = vmatpush1.bf16.xpose.msra.mxu0 0
        %977 = vmatprep.subr.bf16.mxu0 0
        %978 = vmatpush1.bf16.xpose.msra.mxu0 0
        %979 = vmatprep.subr.bf16.mxu0 0
        %980 = vmatpush1.bf16.xpose.msra.mxu0 0
        %981 = vmatprep.subr.bf16.mxu0 0
        %982 = vmatpush1.bf16.xpose.msra.mxu0 0
        %983 = vmatprep.subr.bf16.mxu0 0
        %984 = vmatpush1.bf16.xpose.msra.mxu0 0
        %985 = vmatprep.subr.bf16.mxu0 0
        %986 = vmatpush1.bf16.xpose.msra.mxu0 0
        %987 = vmatprep.subr.bf16.mxu0 0
        %988 = vmatpush1.bf16.xpose.msra.mxu0 0
        %989 = vmatprep.subr.bf16.mxu0 0
        %990 = vmatpush1.bf16.xpose.msra.mxu0 0
        %991 = vmatprep.subr.bf16.mxu0 0
        %992 = vmatpush1.bf16.xpose.msra.mxu0 0
        %993 = vmatprep.subr.bf16.mxu0 0
        %994 = vmatpush1.bf16.xpose.msra.mxu0 0
        %995 = vmatprep.mubr.bf16.mxu0 0
        %996 = vmatmul.mubr.bf16.gmra.mrb[0].mxu0 %v958
        %v997 = vpop.f32.mrb[0].mxu0
        %v998 = vadd.f32 %v833, %v997
        %v999 = vpop.f32.mrb[0].mxu0
        %v1000 = vpop.f32.mrb[0].mxu0
        %v1001 = vpop.f32.mrb[0].mxu0
        %1002 = vdwg.mxu0
        %v1003 = vsel %vm882, %v998, -inf
        %1004 = vmax.xlane.f32.xlu0 %v1003
        %v1005 = vpop.xlane.xlu0 %1004
        %v1006 = vsub.f32 %v998, %v1005
        %v1007 = vmul.f32 %v1006, 1.442695
        %v1008 = vpow.pop %v1007
        %v1009 = vsel %vm882, %v1008, 0.0
        %1010 = vadd.xlane.f32.xlu0 %v1009
        %v1011 = vpop.xlane.xlu0 %1010
        %v1012 = vrcp.pop %v1011
        %v1013 = vmul.f32 %v1008, %v1012
        %v1014 = vpack.c.bf16 %v1013, %v1013
        %1015 = vrot.lane.b32.xlu0 %v954, 80
        %v1016 = vpop.permute.xlu0 %1015
        %v1018 = vsel %vm882, %v1014, 0
        %v1021 = vsel %vm903, %v1016, 0
        %1023 = vmatprep.subr.bf16.mxu0 0
        %1024 = vmatpush1.bf16.msra.mxu0 %v1021
        %1025 = vmatprep.subr.bf16.mxu0 0
        %1026 = vmatpush1.bf16.msra.mxu0 0
        %1027 = vmatprep.subr.bf16.mxu0 0
        %1028 = vmatpush1.bf16.msra.mxu0 0
        %1029 = vmatprep.subr.bf16.mxu0 0
        %1030 = vmatpush1.bf16.msra.mxu0 0
        %1031 = vmatprep.subr.bf16.mxu0 0
        %1032 = vmatpush1.bf16.msra.mxu0 0
        %1033 = vmatprep.subr.bf16.mxu0 0
        %1034 = vmatpush1.bf16.msra.mxu0 0
        %1035 = vmatprep.subr.bf16.mxu0 0
        %1036 = vmatpush1.bf16.msra.mxu0 0
        %1037 = vmatprep.subr.bf16.mxu0 0
        %1038 = vmatpush1.bf16.msra.mxu0 0
        %1039 = vmatprep.subr.bf16.mxu0 0
        %1040 = vmatpush1.bf16.msra.mxu0 0
        %1041 = vmatprep.subr.bf16.mxu0 0
        %1042 = vmatpush1.bf16.msra.mxu0 0
        %1043 = vmatprep.subr.bf16.mxu0 0
        %1044 = vmatpush1.bf16.msra.mxu0 0
        %1045 = vmatprep.subr.bf16.mxu0 0
        %1046 = vmatpush1.bf16.msra.mxu0 0
        %1047 = vmatprep.subr.bf16.mxu0 0
        %1048 = vmatpush1.bf16.msra.mxu0 0
        %1049 = vmatprep.subr.bf16.mxu0 0
        %1050 = vmatpush1.bf16.msra.mxu0 0
        %1051 = vmatprep.subr.bf16.mxu0 0
        %1052 = vmatpush1.bf16.msra.mxu0 0
        %1053 = vmatprep.subr.bf16.mxu0 0
        %1054 = vmatpush1.bf16.msra.mxu0 0
        %1055 = vmatprep.mubr.bf16.mxu0 0
        %1056 = vmatmul.mubr.bf16.gmra.mrb[0].mxu0 %v1018
        %v1057 = vpop.f32.mrb[0].mxu0
        %v1058 = vadd.f32 0.0, %v1057
        %v1059 = vpop.f32.mrb[0].mxu0
        %v1060 = vpop.f32.mrb[0].mxu0
        %v1061 = vpop.f32.mrb[0].mxu0
        %1062 = vdwg.mxu0
        %1064 = vrot.lane.b32.xlu0 %v1058, 16
        %v1065 = vpop.permute.xlu0 %1064
        %vm1067 = vcmask 261248
        %1068 = vst.msk [vmem:[#allocation3] sm:$0xff] %vm1067, %v1065
        %v1069 = vld [vmem:[#allocation3] sm:$0xff]
        %v1070 = vpack.c.bf16 %v1069, %v1069
        %v1071 = vld [vmem:[#allocation10] sm:$0xf]
        %v1072 = vld [vmem:[#allocation10 + $0x4] sm:$0xf]
        %v1073 = vld [vmem:[#allocation10 + $0x8] sm:$0xf]
        %v1074 = vld [vmem:[#allocation10 + $0xc] sm:$0xf]
        %v1075 = vld [vmem:[#allocation12] sm:$0x1]
        %v1077 = vlaneseq
        %v1078 = vshrl.u32 %v1077, 7
        %v1079 = vsub.s32 0, %v1078
        %v1080 = vrot.slane %v1075, %v1079
        %v1086 = vunpack.c.l.b16 %v1071
        %v1087 = vunpack.c.l.b16 %v1072
        %v1088 = vunpack.c.l.b16 %v1073
        %v1089 = vunpack.c.l.b16 %v1074
        %v1090 = vpack.c.b16 %v1087, %v1086
        %v1091 = vpack.c.b16 %v1089, %v1088
        %v1095 = vsel %vm783, %v1070, 0
        %1097 = vmatprep.subr.bf16.mxu0 0
        %1098 = vmatpush1.bf16.msra.mxu0 %v1090
        %1099 = vmatprep.subr.bf16.mxu0 0
        %1100 = vmatpush1.bf16.msra.mxu0 %v1091
        %1101 = vmatprep.subr.bf16.mxu0 0
        %1102 = vmatpush1.bf16.msra.mxu0 0
        %1103 = vmatprep.subr.bf16.mxu0 0
        %1104 = vmatpush1.bf16.msra.mxu0 0
        %1105 = vmatprep.subr.bf16.mxu0 0
        %1106 = vmatpush1.bf16.msra.mxu0 0
        %1107 = vmatprep.subr.bf16.mxu0 0
        %1108 = vmatpush1.bf16.msra.mxu0 0
        %1109 = vmatprep.subr.bf16.mxu0 0
        %1110 = vmatpush1.bf16.msra.mxu0 0
        %1111 = vmatprep.subr.bf16.mxu0 0
        %1112 = vmatpush1.bf16.msra.mxu0 0
        %1113 = vmatprep.subr.bf16.mxu0 0
        %1114 = vmatpush1.bf16.msra.mxu0 0
        %1115 = vmatprep.subr.bf16.mxu0 0
        %1116 = vmatpush1.bf16.msra.mxu0 0
        %1117 = vmatprep.subr.bf16.mxu0 0
        %1118 = vmatpush1.bf16.msra.mxu0 0
        %1119 = vmatprep.subr.bf16.mxu0 0
        %1120 = vmatpush1.bf16.msra.mxu0 0
        %1121 = vmatprep.subr.bf16.mxu0 0
        %1122 = vmatpush1.bf16.msra.mxu0 0
        %1123 = vmatprep.subr.bf16.mxu0 0
        %1124 = vmatpush1.bf16.msra.mxu0 0
        %1125 = vmatprep.subr.bf16.mxu0 0
        %1126 = vmatpush1.bf16.msra.mxu0 0
        %1127 = vmatprep.subr.bf16.mxu0 0
        %1128 = vmatpush1.bf16.msra.mxu0 0
        %1129 = vmatprep.mubr.bf16.mxu0 0
        %1130 = vmatmul.mubr.bf16.gmra.mrb[0].mxu0 %v1095
        %v1131 = vpop.f32.mrb[0].mxu0
        %v1132 = vadd.f32 %v1080, %v1131
        %v1133 = vpop.f32.mrb[0].mxu0
        %v1134 = vpop.f32.mrb[0].mxu0
        %v1135 = vpop.f32.mrb[0].mxu0
        %1136 = vdwg.mxu0
        %v1137 = vadd.f32 %v1132, %v757
        %v1138 = vld [vmem:[#allocation13] sm:$0x1]
        %v1139 = vld [vmem:[%s10] sm:$0x1]
        %v1140 = vsel %vm783, %v1137, 0.0
        %1141 = vadd.xlane.f32.xlu0 %v1140
        %v1142 = vpop.xlane.xlu0 %1141
        %v1143 = vmul.f32 %v1137, %v1137
        %v1144 = vsel %vm783, %v1143, 0.0
        %1145 = vadd.xlane.f32.xlu0 %v1144
        %v1146 = vpop.xlane.xlu0 %1145
        %v1147 = vmul.f32 %v1142, 0.03125
        %v1148 = vmul.f32 %v1146, 0.03125
        %v1149 = vmul.f32 %v1147, %v1147
        %v1150 = vsub.f32 %v1148, %v1149
        %v1151 = vmax.f32 %v1150, 0.0
        %v1152 = vsub.f32 %v1137, %v1147
        %v1153 = vadd.f32 %v1151, 1e-12
        %v1154 = vrsqrt.pop %v1153
        %v1155 = vmul.f32 %v1152, %v1154
        %v1157 = vlaneseq
        %v1158 = vshrl.u32 %v1157, 7
        %v1159 = vsub.s32 0, %v1158
        %v1160 = vrot.slane %v1138, %v1159
        %v1162 = vmul.f32 %v1155, %v1160
        %v1164 = vlaneseq
        %v1165 = vshrl.u32 %v1164, 7
        %v1166 = vsub.s32 0, %v1165
        %v1167 = vrot.slane %v1139, %v1166
        %v1169 = vadd.f32 %v1162, %v1167
        %v1170 = vpack.c.bf16 %v1169, %v1169
        %v1171 = vld [vmem:[%s11] sm:$0xf]
        %v1172 = vld [vmem:[%s11 + $0x4] sm:$0xf]
        %v1173 = vld [vmem:[%s11 + $0x8] sm:$0xf]
        %v1174 = vld [vmem:[%s11 + $0xc] sm:$0xf]
        %v1175 = vld [vmem:[%s12] sm:$0x1]
        %v1177 = vlaneseq
        %v1178 = vshrl.u32 %v1177, 7
        %v1179 = vsub.s32 0, %v1178
        %v1180 = vrot.slane %v1175, %v1179
        %v1186 = vunpack.c.l.b16 %v1171
        %v1187 = vunpack.c.l.b16 %v1172
        %v1188 = vunpack.c.l.b16 %v1173
        %v1189 = vunpack.c.l.b16 %v1174
        %v1190 = vpack.c.b16 %v1187, %v1186
        %v1191 = vpack.c.b16 %v1189, %v1188
        %v1195 = vsel %vm783, %v1170, 0
        %1197 = vmatprep.subr.bf16.mxu0 0
        %1198 = vmatpush1.bf16.msra.mxu0 %v1190
        %1199 = vmatprep.subr.bf16.mxu0 0
        %1200 = vmatpush1.bf16.msra.mxu0 %v1191
        %1201 = vmatprep.subr.bf16.mxu0 0
        %1202 = vmatpush1.bf16.msra.mxu0 0
        %1203 = vmatprep.subr.bf16.mxu0 0
        %1204 = vmatpush1.bf16.msra.mxu0 0
        %1205 = vmatprep.subr.bf16.mxu0 0
        %1206 = vmatpush1.bf16.msra.mxu0 0
        %1207 = vmatprep.subr.bf16.mxu0 0
        %1208 = vmatpush1.bf16.msra.mxu0 0
        %1209 = vmatprep.subr.bf16.mxu0 0
        %1210 = vmatpush1.bf16.msra.mxu0 0
        %1211 = vmatprep.subr.bf16.mxu0 0
        %1212 = vmatpush1.bf16.msra.mxu0 0
        %1213 = vmatprep.subr.bf16.mxu0 0
        %1214 = vmatpush1.bf16.msra.mxu0 0
        %1215 = vmatprep.subr.bf16.mxu0 0
        %1216 = vmatpush1.bf16.msra.mxu0 0
        %1217 = vmatprep.subr.bf16.mxu0 0
        %1218 = vmatpush1.bf16.msra.mxu0 0
        %1219 = vmatprep.subr.bf16.mxu0 0
        %1220 = vmatpush1.bf16.msra.mxu0 0
        %1221 = vmatprep.subr.bf16.mxu0 0
        %1222 = vmatpush1.bf16.msra.mxu0 0
        %1223 = vmatprep.subr.bf16.mxu0 0
        %1224 = vmatpush1.bf16.msra.mxu0 0
        %1225 = vmatprep.subr.bf16.mxu0 0
        %1226 = vmatpush1.bf16.msra.mxu0 0
        %1227 = vmatprep.subr.bf16.mxu0 0
        %1228 = vmatpush1.bf16.msra.mxu0 0
        %1229 = vmatprep.mubr.bf16.mxu0 0
        %1230 = vmatmul.mubr.bf16.gmra.mrb[0].mxu0 %v1195
        %v1231 = vpop.f32.mrb[0].mxu0
        %v1232 = vadd.f32 %v1180, %v1231
        %v1233 = vpop.f32.mrb[0].mxu0
        %v1234 = vpop.f32.mrb[0].mxu0
        %v1235 = vpop.f32.mrb[0].mxu0
        %1236 = vdwg.mxu0
        %v1237 = vmul.f32 %v1232, 0.5
        %v1238 = vmul.f32 %v1232, 0.044715
        %v1239 = vmul.f32 %v1238, %v1232
        %v1240 = vmul.f32 %v1239, %v1232
        %v1241 = vadd.f32 %v1232, %v1240
        %v1242 = vmul.f32 %v1241, 0.7978846
        %v1243 = vtanh.pop %v1242
        %v1244 = vadd.f32 %v1243, 1.0
        %v1245 = vmul.f32 %v1237, %v1244
        %v1246 = vpack.c.bf16 %v1245, %v1245
        %v1247 = vld [vmem:[%s13] sm:$0xf]
        %v1248 = vld [vmem:[%s13 + $0x4] sm:$0xf]
        %v1249 = vld [vmem:[%s13 + $0x8] sm:$0xf]
        %v1250 = vld [vmem:[%s13 + $0xc] sm:$0xf]
        %v1251 = vld [vmem:[%s13 + $0x10] sm:$0xf]
        %v1252 = vld [vmem:[%s13 + $0x14] sm:$0xf]
        %v1253 = vld [vmem:[%s13 + $0x18] sm:$0xf]
        %v1254 = vld [vmem:[%s13 + $0x1c] sm:$0xf]
        %v1255 = vld [vmem:[%s14] sm:$0x1]
        %v1257 = vlaneseq
        %v1258 = vshrl.u32 %v1257, 7
        %v1259 = vsub.s32 0, %v1258
        %v1260 = vrot.slane %v1255, %v1259
        %v1270 = vunpack.c.l.b16 %v1247
        %v1271 = vunpack.c.l.b16 %v1248
        %v1272 = vunpack.c.l.b16 %v1249
        %v1273 = vunpack.c.l.b16 %v1250
        %v1274 = vunpack.c.l.b16 %v1251
        %v1275 = vunpack.c.l.b16 %v1252
        %v1276 = vunpack.c.l.b16 %v1253
        %v1277 = vunpack.c.l.b16 %v1254
        %v1278 = vpack.c.b16 %v1271, %v1270
        %v1279 = vpack.c.b16 %v1273, %v1272
        %v1280 = vpack.c.b16 %v1275, %v1274
        %v1281 = vpack.c.b16 %v1277, %v1276
        %vm1286 = vcmask 523264
        %v1288 = vsel %vm1286, %v1246, 0
        %1290 = vmatprep.subr.bf16.mxu0 0
        %1291 = vmatpush1.bf16.msra.mxu0 %v1278
        %1292 = vmatprep.subr.bf16.mxu0 0
        %1293 = vmatpush1.bf16.msra.mxu0 %v1279
        %1294 = vmatprep.subr.bf16.mxu0 0
        %1295 = vmatpush1.bf16.msra.mxu0 %v1280
        %1296 = vmatprep.subr.bf16.mxu0 0
        %1297 = vmatpush1.bf16.msra.mxu0 %v1281
        %1298 = vmatprep.subr.bf16.mxu0 0
        %1299 = vmatpush1.bf16.msra.mxu0 0
        %1300 = vmatprep.subr.bf16.mxu0 0
        %1301 = vmatpush1.bf16.msra.mxu0 0
        %1302 = vmatprep.subr.bf16.mxu0 0
        %1303 = vmatpush1.bf16.msra.mxu0 0
        %1304 = vmatprep.subr.bf16.mxu0 0
        %1305 = vmatpush1.bf16.msra.mxu0 0
        %1306 = vmatprep.subr.bf16.mxu0 0
        %1307 = vmatpush1.bf16.msra.mxu0 0
        %1308 = vmatprep.subr.bf16.mxu0 0
        %1309 = vmatpush1.bf16.msra.mxu0 0
        %1310 = vmatprep.subr.bf16.mxu0 0
        %1311 = vmatpush1.bf16.msra.mxu0 0
        %1312 = vmatprep.subr.bf16.mxu0 0
        %1313 = vmatpush1.bf16.msra.mxu0 0
        %1314 = vmatprep.subr.bf16.mxu0 0
        %1315 = vmatpush1.bf16.msra.mxu0 0
        %1316 = vmatprep.subr.bf16.mxu0 0
        %1317 = vmatpush1.bf16.msra.mxu0 0
        %1318 = vmatprep.subr.bf16.mxu0 0
        %1319 = vmatpush1.bf16.msra.mxu0 0
        %1320 = vmatprep.subr.bf16.mxu0 0
        %1321 = vmatpush1.bf16.msra.mxu0 0
        %1322 = vmatprep.mubr.bf16.mxu0 0
        %1323 = vmatmul.mubr.bf16.gmra.mrb[0].mxu0 %v1288
        %v1324 = vpop.f32.mrb[0].mxu0
        %v1325 = vadd.f32 %v1260, %v1324
        %v1326 = vpop.f32.mrb[0].mxu0
        %v1327 = vpop.f32.mrb[0].mxu0
        %v1328 = vpop.f32.mrb[0].mxu0
        %1329 = vdwg.mxu0
        %v1330 = vadd.f32 %v1325, %v1169
        %v1331 = vld [vmem:[%s15] sm:$0x1]
        %v1332 = vld [vmem:[%s16] sm:$0x1]
        %v1333 = vsel %vm783, %v1330, 0.0
        %1334 = vadd.xlane.f32.xlu0 %v1333
        %v1335 = vpop.xlane.xlu0 %1334
        %v1336 = vmul.f32 %v1330, %v1330
        %v1337 = vsel %vm783, %v1336, 0.0
        %1338 = vadd.xlane.f32.xlu0 %v1337
        %v1339 = vpop.xlane.xlu0 %1338
        %v1340 = vmul.f32 %v1335, 0.03125
        %v1341 = vmul.f32 %v1339, 0.03125
        %v1342 = vmul.f32 %v1340, %v1340
        %v1343 = vsub.f32 %v1341, %v1342
        %v1344 = vmax.f32 %v1343, 0.0
        %v1345 = vsub.f32 %v1330, %v1340
        %v1346 = vadd.f32 %v1344, 1e-12
        %v1347 = vrsqrt.pop %v1346
        %v1348 = vmul.f32 %v1345, %v1347
        %v1350 = vlaneseq
        %v1351 = vshrl.u32 %v1350, 7
        %v1352 = vsub.s32 0, %v1351
        %v1353 = vrot.slane %v1331, %v1352
        %v1355 = vmul.f32 %v1348, %v1353
        %v1357 = vlaneseq
        %v1358 = vshrl.u32 %v1357, 7
        %v1359 = vsub.s32 0, %v1358
        %v1360 = vrot.slane %v1332, %v1359
        %v1362 = vadd.f32 %v1355, %v1360
        %1363 = vst.msk [vmem:[%s665] sm:$0xff] %vm783, %v1362
        %s1364 = sand.u32 %s431, 1
        %s1365 = scalar_lea.sflag [#allocation6], %s1364
        %s1366 = sand.u32 %s431, 1
        %s1367 = smul.addr %s1366, 8
        %s1368 = scalar_lea.vmem [#allocation15], %s1367
        // Predicated region
        $region117: #{tpu_custom_call.1} parent=87 // pred_check
          %p1369 = pneg %p441
        $region118: #{tpu_custom_call.1} parent=87 // pred_check_branch
          %1371 = sbr.rel (%p1369) target = $region120
        $region119: #{tpu_custom_call.1} parent=87 // pred_region
          %s1373 = ssub.s32 128, 128
          %1374 = vsyncadd %s1365, %s1373
          %s1375 = sadd.s32 %s40, %s39
          %s1376 = smul.addr %s1375, 128
          %s1377 = scalar_lea.hbm %s17, %s1376
          %s1379 = sshll.u32 %s1368, 4
          %s1380 = int_to_ptr.vmem [resolvable:$true] %s1379
          %1382 = dma.vmem_to_hbm [thread:$0]  %s1380, 128, %s1377, %s1365
        $region120: #{tpu_custom_call.1} parent=87 // pred_fallthru
          _
      $region88: #{tpu_custom_call.1} parent=5 // pred_fallthru
        _
      %p1383 = scmp.le.s32.totalorder 2, %s30
      // Predicated region
      $region121: #{tpu_custom_call.1} parent=5 // pred_check
        %p1384 = pneg %p1383
      $region122: #{tpu_custom_call.1} parent=5 // pred_check_branch
        %1386 = sbr.rel (%p1384) target = $region124
      $region123: #{tpu_custom_call.1} parent=5 // pred_region
        %s1387 = ssub.s32 %s30, 2
        // Predicated region
        $region125: #{tpu_custom_call.1} parent=123 // pred_check
          %p1388 = pneg %p447
        $region126: #{tpu_custom_call.1} parent=123 // pred_check_branch
          %1390 = sbr.rel (%p1388) target = $region128
        $region127: #{tpu_custom_call.1} parent=123 // pred_region
          %s1391 = sand.u32 %s432, 1
          %s1392 = scalar_lea.sflag [#allocation6], %s1391
          %s1393 = sand.u32 %s432, 1
          %s1394 = smul.addr %s1393, 8
          %s1395 = scalar_lea.vmem [#allocation15], %s1394
          %1396 = dma.done %s1392, 128
        $region128: #{tpu_custom_call.1} parent=123 // pred_fallthru
          _
      $region124: #{tpu_custom_call.1} parent=5 // pred_fallthru
        _
    $region6: #{tpu_custom_call.1} parent=1 // loop_footer
      %s34 = sadd.s32 1, %s30
    $region7: #{tpu_custom_call.1} parent=1 // loop_footer_branch
      %29 = sbr.rel target = $region3
    $region8: #{tpu_custom_call.1} parent=1 // loop_exit
      _
    %1397 = vsyncpa [#allocation5], 1
    %s1398 = scalar_lea.sflag [#allocation5], 1
    %1399 = vsyncpa %s1398, 1
    %1400 = vsyncpa [#allocation8], 1
    %1401 = vsyncpa [#allocation11], 1
    %1402 = vsyncpa [#allocation14], 1
    %1403 = vsyncpa [#allocation6], 1
    %s1404 = scalar_lea.sflag [#allocation6], 1
    %1405 = vsyncpa %s1404, 1

</llo_original>
